<compile_context>
chip_gen: v7x
topology: tpu7x:2x2x1
jax: 0.10.0
libtpu: 0.0.40
codegen_flags: <defaults>
</compile_context>

<pallas_src>
import functools

import jax
import jax.numpy as jnp
from jax import lax
from jax.experimental import pallas as pl
from jax.experimental.pallas import tpu as pltpu

EPS = 1e-5  # nn.BatchNorm2d default


# ----------------------------------------------------------------------------
# Bilinear 2x upsample matching F.interpolate(mode='bilinear', align_corners=False).
# Gather-based index prep; stays in XLA.
# TODO(synk): ancient PyTorch F.upsample defaulted to align_corners=True; modern torch
#             (the given spec) resolves to align_corners=False, implemented here.
# ----------------------------------------------------------------------------
def _bilinear_upsample_2x(x):
    n, c, h, w = x.shape
    ho, wo = 2 * h, 2 * w

    def idx(out_size, in_size):
        s = in_size / out_size
        src = (jnp.arange(out_size, dtype=jnp.float32) + 0.5) * s - 0.5
        src = jnp.maximum(src, 0.0)
        lo = jnp.minimum(jnp.floor(src).astype(jnp.int32), in_size - 1)
        hi = jnp.minimum(lo + 1, in_size - 1)
        frac = src - lo.astype(jnp.float32)
        return lo, hi, frac

    ylo, yhi, fy = idx(ho, h)
    xlo, xhi, fx = idx(wo, w)
    top = x[:, :, ylo, :]
    bot = x[:, :, yhi, :]
    rows = top * (1.0 - fy)[None, None, :, None] + bot * fy[None, None, :, None]
    left = rows[:, :, :, xlo]
    right = rows[:, :, :, xhi]
    return left * (1.0 - fx)[None, None, None, :] + right * fx[None, None, None, :]


# ----------------------------------------------------------------------------
# Pass 1: 3x3 conv as one K=9*Cin MXU contraction on the flattened padded grid,
# plus masked per-image BN partial statistics (from the f32 accumulator).
# ----------------------------------------------------------------------------
def _conv_stats_kernel(x_ref, w_ref, mask_ref, conv_ref, stats_ref, slab_ref,
                       *, wp, gp, cin_p):
    # x_ref    : [1, Cin_p, Lspad] bf16  flattened zero-padded image (+1/+1 flat pad)
    # w_ref    : [Cout, 9*Cin_p]   bf16  tap-stacked weight matrix
    # mask_ref : [1, Gp]           f32   1.0 on real columns, 0.0 on garbage columns
    # conv_ref : [1, Cout, Gp]     bf16  conv output on the padded-width grid
    # stats_ref: [1, Cout, 2]      f32   masked per-image [sum, sum_sq] (BN partials)
    # slab_ref : [9*Cin_p, Gp]     bf16  VMEM scratch: 9 shifted input windows
    for kh in range(3):
        for kw in range(3):
            k = kh * 3 + kw
            off = kh * wp + kw                         # static tap offset
            slab_ref[k * cin_p:(k + 1) * cin_p, :] = x_ref[0, :, off:off + gp]

    acc = jnp.dot(w_ref[...], slab_ref[...],           # one 9*Cin-deep contraction
                  preferred_element_type=jnp.float32)  # [Cout, Gp] f32
    conv_ref[0] = acc.astype(conv_ref.dtype)

    am = acc * mask_ref[...]                           # zero garbage columns (f32 acc)
    stats_ref[0, :, 0:1] = jnp.sum(am, axis=-1, keepdims=True)
    stats_ref[0, :, 1:2] = jnp.sum(am * acc, axis=-1, keepdims=True)


# ----------------------------------------------------------------------------
# Pass 2: BatchNorm apply + PReLU + crop of the 2 garbage columns per row.
# Writes the final NCHW result directly (no separate XLA slice pass).
# ----------------------------------------------------------------------------
def _bn_prelu_kernel(conv_ref, scale_ref, shift_ref, a_ref, out_ref, *, wo):
    x = conv_ref[0].astype(jnp.float32)                      # [Cout, Ho, Wp]
    y = x[:, :, 1:1 + wo] * scale_ref[0] + shift_ref[0]      # crop + BN affine
    a = a_ref[0]                                             # PReLU slope (SMEM scalar)
    out_ref[0] = jnp.maximum(y, 0.0) + a * jnp.minimum(y, 0.0)


@jax.jit
def psp_upsample_forward(x, weight, bias, gamma, beta, prelu_a):
    # The Conv2d bias shifts every element of a channel by the same constant, so
    # training-mode BatchNorm removes it exactly (the batch mean shifts by the bias,
    # the variance is unchanged) -- it never needs to enter the kernels.
    del bias

    n, cin, h, w = x.shape
    cout = weight.shape[0]
    ho, wo = 2 * h, 2 * w
    hp, wp = ho + 2, wo + 2          # conv padding = 1
    gp = ho * wp                     # padded-width output grid per image (lane axis)
    lspad = hp * wp + 2              # +1 front / +1 back keeps all 9 taps in bounds
    cin_p = -(-cin // 8) * 8         # sublane-align each tap's slab row-block

    # ---- input prep (XLA): upsample, zero-pad (spatial + channel), flatten, bf16 ----
    up = _bilinear_upsample_2x(x)                                        # [N,Cin,Ho,Wo]
    xp = jnp.pad(up, ((0, 0), (0, cin_p - cin), (1, 1), (1, 1)))         # [N,Cin_p,Hp,Wp]
    spad = jnp.pad(xp.reshape(n, cin_p, hp * wp),
                   ((0, 0), (0, 0), (1, 1))).astype(jnp.bfloat16)        # [N,Cin_p,Lspad]

    # Tap-stacked weights: W[o, (kh*3+kw)*Cin_p + c] = weight[o, c, kh, kw]
    w_mat = jnp.pad(weight, ((0, 0), (0, cin_p - cin), (0, 0), (0, 0)))
    w_mat = w_mat.transpose(0, 2, 3, 1).reshape(cout, 9 * cin_p).astype(jnp.bfloat16)

    col = jnp.arange(gp, dtype=jnp.int32) % wp
    mask = ((col >= 1) & (col <= wp - 2)).astype(jnp.float32).reshape(1, gp)

    cparams = pltpu.CompilerParams(dimension_semantics=("parallel",),
                                   vmem_limit_bytes=48 * 1024 * 1024)

    # ---- pass 1: conv (single MXU contraction) + per-image BN partial stats --------
    conv, stats = pl.pallas_call(
        functools.partial(_conv_stats_kernel, wp=wp, gp=gp, cin_p=cin_p),
        out_shape=(jax.ShapeDtypeStruct((n, cout, gp), jnp.bfloat16),
                   jax.ShapeDtypeStruct((n, cout, 2), jnp.float32)),
        grid=(n,),
        in_specs=[pl.BlockSpec((1, cin_p, lspad), lambda i: (i, 0, 0)),
                  pl.BlockSpec((cout, 9 * cin_p), lambda i: (0, 0)),
                  pl.BlockSpec((1, gp), lambda i: (0, 0))],
        out_specs=(pl.BlockSpec((1, cout, gp), lambda i: (i, 0, 0)),
                   pl.BlockSpec((1, cout, 2), lambda i: (i, 0, 0))),
        scratch_shapes=[pltpu.VMEM((9 * cin_p, gp), jnp.bfloat16)],
        compiler_params=cparams,
    )(spad, w_mat, mask)

    # ---- BN batch statistics (training mode, biased variance) ----------------------
    count = jnp.float32(n * ho * wo)
    mean = jnp.sum(stats[:, :, 0], axis=0) / count                      # [Cout]
    var = jnp.sum(stats[:, :, 1], axis=0) / count - mean * mean
    # TODO(synk): E[x^2]-mean^2 in f32 can cancel for large-mean activations; a
    # centered (Welford-style) second accumulation would be more robust.
    var = jnp.maximum(var, 0.0)
    inv = lax.rsqrt(var + EPS)
    scale = (gamma * inv).reshape(1, cout, 1, 1).astype(jnp.float32)
    shift = (beta - mean * gamma * inv).reshape(1, cout, 1, 1).astype(jnp.float32)
    a1 = jnp.reshape(prelu_a, (1,)).astype(jnp.float32)

    # ---- pass 2: BN apply + PReLU + crop, writing final NCHW directly --------------
    conv4 = conv.reshape(n, cout, ho, wp)            # metadata-only reshape
    y = pl.pallas_call(
        functools.partial(_bn_prelu_kernel, wo=wo),
        out_shape=jax.ShapeDtypeStruct((n, cout, ho, wo), jnp.float32),
        grid=(n,),
        in_specs=[pl.BlockSpec((1, cout, ho, wp), lambda i: (i, 0, 0, 0)),
                  pl.BlockSpec((1, cout, 1, 1), lambda i: (0, 0, 0, 0)),
                  pl.BlockSpec((1, cout, 1, 1), lambda i: (0, 0, 0, 0)),
                  pl.BlockSpec(memory_space=pltpu.MemorySpace.SMEM)],
        out_specs=pl.BlockSpec((1, cout, ho, wo), lambda i: (i, 0, 0, 0)),
        compiler_params=cparams,
    )(conv4, scale, shift, a1)
    return y


# ----------------------------------------------------------------------------
# Reference (plain JAX).  Inputs/weights are bf16-quantized (matches the MXU feed);
# the conv itself and BN stats stay f32, so the only unmatched deviation is the bf16
# conv intermediate used by pass 2 (bounded by the assert tolerance below).
# ----------------------------------------------------------------------------
def _reference(x, weight, bias, gamma, beta, a):
    up = _bilinear_upsample_2x(x)
    upq = up.astype(jnp.bfloat16).astype(jnp.float32)
    wq = weight.astype(jnp.bfloat16).astype(jnp.float32)
    conv = lax.conv_general_dilated(
        upq, wq, window_strides=(1, 1), padding=((1, 1), (1, 1)),
        dimension_numbers=("NCHW", "OIHW", "NCHW"))
    conv = conv + bias.reshape(1, -1, 1, 1)
    mu = conv.mean(axis=(0, 2, 3), keepdims=True)
    var = conv.var(axis=(0, 2, 3), keepdims=True)            # biased (BN training mode)
    y = (conv - mu) * lax.rsqrt(var + EPS)
    y = y * gamma.reshape(1, -1, 1, 1) + beta.reshape(1, -1, 1, 1)
    return jnp.maximum(y, 0.0) + a * jnp.minimum(y, 0.0)


if __name__ == "__main__":
    key = jax.random.PRNGKey(0)
    k_x, k_w, k_b = jax.random.split(key, 3)

    N, C_IN, H, W = 2, 4, 16, 16
    C_OUT = 8

    x = jax.random.normal(k_x, (N, C_IN, H, W), dtype=jnp.float32)
    weight = 0.1 * jax.random.normal(k_w, (C_OUT, C_IN, 3, 3), dtype=jnp.float32)
    bias = 0.1 * jax.random.normal(k_b, (C_OUT,), dtype=jnp.float32)
    gamma = jnp.ones((C_OUT,), jnp.float32)      # nn.BatchNorm2d default weight
    beta = jnp.zeros((C_OUT,), jnp.float32)      # nn.BatchNorm2d default bias
    prelu_a = jnp.asarray(0.25, jnp.float32)     # nn.PReLU default single parameter

    out = psp_upsample_forward(x, weight, bias, gamma, beta, prelu_a)
    out = jax.block_until_ready(out)

    ref = _reference(x, weight, bias, gamma, beta, prelu_a)
    assert out.shape == (N, C_OUT, 2 * H, 2 * W), out.shape
    max_err = float(jnp.max(jnp.abs(out - ref)))
    # bf16 MXU feeds + bf16 conv intermediate vs. the f32 reference conv: the
    # post-normalization error budget is ~1e-2 worst case at these scales.
    assert jnp.allclose(out, ref, atol=2e-2, rtol=2e-2), f"mismatch vs reference: {max_err}"

    print("KERNEL_OK")
</pallas_src>

<mosaic_0001>
module attributes {stable_mosaic.version = 11 : i64} {
  func.func @_conv_stats_kernel(%arg0: i32, %arg1: memref<1x8x1158xbf16, #tpu.memory_space<vmem>>, %arg2: memref<8x72xbf16, #tpu.memory_space<vmem>>, %arg3: memref<1x1088xf32, #tpu.memory_space<vmem>>, %arg4: memref<1x8x1088xbf16, #tpu.memory_space<vmem>>, %arg5: memref<1x8x2xf32, #tpu.memory_space<vmem>>, %arg6: memref<72x1088xbf16, #tpu.memory_space<vmem>>) attributes {dimension_semantics = [#tpu.dimension_semantics<parallel>], iteration_bounds = array<i64: 2>, scalar_prefetch = 0 : i64, scratch_operands = 1 : i64, tpu.core_type = #tpu.core_type<tc>, window_params = [{transform_indices = @transform_0, window_bounds = array<i64: 1, 8, 1158>}, {pipeline_mode = #tpu.pipeline_mode<synchronous>, transform_indices = @transform_1, window_bounds = array<i64: 8, 72>}, {pipeline_mode = #tpu.pipeline_mode<synchronous>, transform_indices = @transform_2, window_bounds = array<i64: 1, 1088>}, {transform_indices = @transform_3, window_bounds = array<i64: 1, 8, 1088>}, {transform_indices = @transform_4, window_bounds = array<i64: 1, 8, 2>}]} {
    %c0 = arith.constant 0 : index
    %c0_0 = arith.constant 0 : index
    %c0_1 = arith.constant 0 : index
    %0 = vector.load %arg1[%c0, %c0_0, %c0_1] : memref<1x8x1158xbf16, #tpu.memory_space<vmem>>, vector<1x8x1088xbf16>
    %1 = vector.shape_cast %0 : vector<1x8x1088xbf16> to vector<8x1088xbf16>
    %c0_2 = arith.constant 0 : index
    %c0_3 = arith.constant 0 : index
    %2 = vector.load %arg6[%c0_2, %c0_3] : memref<72x1088xbf16, #tpu.memory_space<vmem>>, vector<8x1088xbf16>
    tpu.vector_store %arg6[%c0_2, %c0_3], %1 {strides = array<i32>} : memref<72x1088xbf16, #tpu.memory_space<vmem>>, vector<8x1088xbf16>,
    %c0_4 = arith.constant 0 : index
    %c0_5 = arith.constant 0 : index
    %c1 = arith.constant 1 : index
    %3 = vector.load %arg1[%c0_4, %c0_5, %c1] : memref<1x8x1158xbf16, #tpu.memory_space<vmem>>, vector<1x8x1088xbf16>
    %4 = vector.shape_cast %3 : vector<1x8x1088xbf16> to vector<8x1088xbf16>
    %c8 = arith.constant 8 : index
    %c0_6 = arith.constant 0 : index
    %5 = vector.load %arg6[%c8, %c0_6] : memref<72x1088xbf16, #tpu.memory_space<vmem>>, vector<8x1088xbf16>
    tpu.vector_store %arg6[%c8, %c0_6], %4 {strides = array<i32>} : memref<72x1088xbf16, #tpu.memory_space<vmem>>, vector<8x1088xbf16>,
    %c0_7 = arith.constant 0 : index
    %c0_8 = arith.constant 0 : index
    %c2 = arith.constant 2 : index
    %6 = vector.load %arg1[%c0_7, %c0_8, %c2] : memref<1x8x1158xbf16, #tpu.memory_space<vmem>>, vector<1x8x1088xbf16>
    %7 = vector.shape_cast %6 : vector<1x8x1088xbf16> to vector<8x1088xbf16>
    %c16 = arith.constant 16 : index
    %c0_9 = arith.constant 0 : index
    %8 = vector.load %arg6[%c16, %c0_9] : memref<72x1088xbf16, #tpu.memory_space<vmem>>, vector<8x1088xbf16>
    tpu.vector_store %arg6[%c16, %c0_9], %7 {strides = array<i32>} : memref<72x1088xbf16, #tpu.memory_space<vmem>>, vector<8x1088xbf16>,
    %c0_10 = arith.constant 0 : index
    %c0_11 = arith.constant 0 : index
    %c34 = arith.constant 34 : index
    %9 = vector.load %arg1[%c0_10, %c0_11, %c34] : memref<1x8x1158xbf16, #tpu.memory_space<vmem>>, vector<1x8x1088xbf16>
    %10 = vector.shape_cast %9 : vector<1x8x1088xbf16> to vector<8x1088xbf16>
    %c24 = arith.constant 24 : index
    %c0_12 = arith.constant 0 : index
    %11 = vector.load %arg6[%c24, %c0_12] : memref<72x1088xbf16, #tpu.memory_space<vmem>>, vector<8x1088xbf16>
    tpu.vector_store %arg6[%c24, %c0_12], %10 {strides = array<i32>} : memref<72x1088xbf16, #tpu.memory_space<vmem>>, vector<8x1088xbf16>,
    %c0_13 = arith.constant 0 : index
    %c0_14 = arith.constant 0 : index
    %c35 = arith.constant 35 : index
    %12 = vector.load %arg1[%c0_13, %c0_14, %c35] : memref<1x8x1158xbf16, #tpu.memory_space<vmem>>, vector<1x8x1088xbf16>
    %13 = vector.shape_cast %12 : vector<1x8x1088xbf16> to vector<8x1088xbf16>
    %c32 = arith.constant 32 : index
    %c0_15 = arith.constant 0 : index
    %14 = vector.load %arg6[%c32, %c0_15] : memref<72x1088xbf16, #tpu.memory_space<vmem>>, vector<8x1088xbf16>
    tpu.vector_store %arg6[%c32, %c0_15], %13 {strides = array<i32>} : memref<72x1088xbf16, #tpu.memory_space<vmem>>, vector<8x1088xbf16>,
    %c0_16 = arith.constant 0 : index
    %c0_17 = arith.constant 0 : index
    %c36 = arith.constant 36 : index
    %15 = vector.load %arg1[%c0_16, %c0_17, %c36] : memref<1x8x1158xbf16, #tpu.memory_space<vmem>>, vector<1x8x1088xbf16>
    %16 = vector.shape_cast %15 : vector<1x8x1088xbf16> to vector<8x1088xbf16>
    %c40 = arith.constant 40 : index
    %c0_18 = arith.constant 0 : index
    %17 = vector.load %arg6[%c40, %c0_18] : memref<72x1088xbf16, #tpu.memory_space<vmem>>, vector<8x1088xbf16>
    tpu.vector_store %arg6[%c40, %c0_18], %16 {strides = array<i32>} : memref<72x1088xbf16, #tpu.memory_space<vmem>>, vector<8x1088xbf16>,
    %c0_19 = arith.constant 0 : index
    %c0_20 = arith.constant 0 : index
    %c68 = arith.constant 68 : index
    %18 = vector.load %arg1[%c0_19, %c0_20, %c68] : memref<1x8x1158xbf16, #tpu.memory_space<vmem>>, vector<1x8x1088xbf16>
    %19 = vector.shape_cast %18 : vector<1x8x1088xbf16> to vector<8x1088xbf16>
    %c48 = arith.constant 48 : index
    %c0_21 = arith.constant 0 : index
    %20 = vector.load %arg6[%c48, %c0_21] : memref<72x1088xbf16, #tpu.memory_space<vmem>>, vector<8x1088xbf16>
    tpu.vector_store %arg6[%c48, %c0_21], %19 {strides = array<i32>} : memref<72x1088xbf16, #tpu.memory_space<vmem>>, vector<8x1088xbf16>,
    %c0_22 = arith.constant 0 : index
    %c0_23 = arith.constant 0 : index
    %c69 = arith.constant 69 : index
    %21 = vector.load %arg1[%c0_22, %c0_23, %c69] : memref<1x8x1158xbf16, #tpu.memory_space<vmem>>, vector<1x8x1088xbf16>
    %22 = vector.shape_cast %21 : vector<1x8x1088xbf16> to vector<8x1088xbf16>
    %c56 = arith.constant 56 : index
    %c0_24 = arith.constant 0 : index
    %23 = vector.load %arg6[%c56, %c0_24] : memref<72x1088xbf16, #tpu.memory_space<vmem>>, vector<8x1088xbf16>
    tpu.vector_store %arg6[%c56, %c0_24], %22 {strides = array<i32>} : memref<72x1088xbf16, #tpu.memory_space<vmem>>, vector<8x1088xbf16>,
    %c0_25 = arith.constant 0 : index
    %c0_26 = arith.constant 0 : index
    %c70 = arith.constant 70 : index
    %24 = vector.load %arg1[%c0_25, %c0_26, %c70] : memref<1x8x1158xbf16, #tpu.memory_space<vmem>>, vector<1x8x1088xbf16>
    %25 = vector.shape_cast %24 : vector<1x8x1088xbf16> to vector<8x1088xbf16>
    %c64 = arith.constant 64 : index
    %c0_27 = arith.constant 0 : index
    %26 = vector.load %arg6[%c64, %c0_27] : memref<72x1088xbf16, #tpu.memory_space<vmem>>, vector<8x1088xbf16>
    tpu.vector_store %arg6[%c64, %c0_27], %25 {strides = array<i32>} : memref<72x1088xbf16, #tpu.memory_space<vmem>>, vector<8x1088xbf16>,
    %c0_28 = arith.constant 0 : index
    %c0_29 = arith.constant 0 : index
    %27 = vector.load %arg2[%c0_28, %c0_29] : memref<8x72xbf16, #tpu.memory_space<vmem>>, vector<8x72xbf16>
    %c0_30 = arith.constant 0 : index
    %c0_31 = arith.constant 0 : index
    %28 = vector.load %arg6[%c0_30, %c0_31] : memref<72x1088xbf16, #tpu.memory_space<vmem>>, vector<72x1088xbf16>
    %cst = arith.constant dense<0.000000e+00> : vector<8x1088xf32>
    %29 = tpu.matmul %27, %28, %cst {dimension_numbers = #tpu.dot_dimension_numbers<[1], [0], [0], [1], [0, 0, 1, 1], [], []>} : vector<8x72xbf16>, vector<72x1088xbf16>, vector<8x1088xf32> -> vector<8x1088xf32>
    %30 = arith.truncf %29 : vector<8x1088xf32> to vector<8x1088xbf16>
    %c0_32 = arith.constant 0 : index
    %c0_33 = arith.constant 0 : index
    %c0_34 = arith.constant 0 : index
    %31 = vector.load %arg4[%c0_32, %c0_33, %c0_34] : memref<1x8x1088xbf16, #tpu.memory_space<vmem>>, vector<1x8x1088xbf16>
    %32 = vector.shape_cast %31 : vector<1x8x1088xbf16> to vector<8x1088xbf16>
    %33 = vector.shape_cast %30 : vector<8x1088xbf16> to vector<1x8x1088xbf16>
    tpu.vector_store %arg4[%c0_32, %c0_33, %c0_34], %33 {strides = array<i32>} : memref<1x8x1088xbf16, #tpu.memory_space<vmem>>, vector<1x8x1088xbf16>,
    %c0_35 = arith.constant 0 : index
    %c0_36 = arith.constant 0 : index
    %34 = vector.load %arg3[%c0_35, %c0_36] : memref<1x1088xf32, #tpu.memory_space<vmem>>, vector<1x1088xf32>
    %35 = vector.broadcast %34 : vector<1x1088xf32> to vector<8x1088xf32>
    %36 = arith.mulf %29, %35 : vector<8x1088xf32>
    %cst_37 = arith.constant dense<0.000000e+00> : vector<8xf32>
    %37 = vector.multi_reduction <add>, %36, %cst_37 [1] : vector<8x1088xf32> to vector<8xf32>
    %38 = vector.shape_cast %37 : vector<8xf32> to vector<8x1xf32>
    %c0_38 = arith.constant 0 : index
    %c0_39 = arith.constant 0 : index
    %c0_40 = arith.constant 0 : index
    %39 = vector.load %arg5[%c0_38, %c0_39, %c0_40] : memref<1x8x2xf32, #tpu.memory_space<vmem>>, vector<1x8x1xf32>
    %40 = vector.shape_cast %39 : vector<1x8x1xf32> to vector<8x1xf32>
    %41 = vector.shape_cast %38 : vector<8x1xf32> to vector<1x8x1xf32>
    tpu.vector_store %arg5[%c0_38, %c0_39, %c0_40], %41 {strides = array<i32>} : memref<1x8x2xf32, #tpu.memory_space<vmem>>, vector<1x8x1xf32>,
    %42 = arith.mulf %36, %29 : vector<8x1088xf32>
    %cst_41 = arith.constant dense<0.000000e+00> : vector<8xf32>
    %43 = vector.multi_reduction <add>, %42, %cst_41 [1] : vector<8x1088xf32> to vector<8xf32>
    %44 = vector.shape_cast %43 : vector<8xf32> to vector<8x1xf32>
    %c0_42 = arith.constant 0 : index
    %c0_43 = arith.constant 0 : index
    %c1_44 = arith.constant 1 : index
    %45 = vector.load %arg5[%c0_42, %c0_43, %c1_44] : memref<1x8x2xf32, #tpu.memory_space<vmem>>, vector<1x8x1xf32>
    %46 = vector.shape_cast %45 : vector<1x8x1xf32> to vector<8x1xf32>
    %47 = vector.shape_cast %44 : vector<8x1xf32> to vector<1x8x1xf32>
    tpu.vector_store %arg5[%c0_42, %c0_43, %c1_44], %47 {strides = array<i32>} : memref<1x8x2xf32, #tpu.memory_space<vmem>>, vector<1x8x1xf32>,
    return
  }
  func.func @transform_0(%arg0: i32) -> (i32, i32, i32) {
    %c0_i32 = arith.constant 0 : i32
    %c0_i32_0 = arith.constant 0 : i32
    %c0_i32_1 = arith.constant 0 : i32
    return %arg0, %c0_i32, %c0_i32_0 : i32, i32, i32
  }
  func.func @transform_1(%arg0: i32) -> (i32, i32) {
    %c0_i32 = arith.constant 0 : i32
    %c0_i32_0 = arith.constant 0 : i32
    %c0_i32_1 = arith.constant 0 : i32
    return %c0_i32, %c0_i32_0 : i32, i32
  }
  func.func @transform_2(%arg0: i32) -> (i32, i32) {
    %c0_i32 = arith.constant 0 : i32
    %c0_i32_0 = arith.constant 0 : i32
    %c0_i32_1 = arith.constant 0 : i32
    return %c0_i32, %c0_i32_0 : i32, i32
  }
  func.func @transform_3(%arg0: i32) -> (i32, i32, i32) {
    %c0_i32 = arith.constant 0 : i32
    %c0_i32_0 = arith.constant 0 : i32
    %c0_i32_1 = arith.constant 0 : i32
    return %arg0, %c0_i32, %c0_i32_0 : i32, i32, i32
  }
  func.func @transform_4(%arg0: i32) -> (i32, i32, i32) {
    %c0_i32 = arith.constant 0 : i32
    %c0_i32_0 = arith.constant 0 : i32
    %c0_i32_1 = arith.constant 0 : i32
    return %arg0, %c0_i32, %c0_i32_0 : i32, i32, i32
  }
}

module attributes {stable_mosaic.version = 11 : i64} {
  func.func @_bn_prelu_kernel(%arg0: i32, %arg1: memref<1x8x32x34xbf16, #tpu.memory_space<vmem>>, %arg2: memref<1x8x1x1xf32, #tpu.memory_space<vmem>>, %arg3: memref<1x8x1x1xf32, #tpu.memory_space<vmem>>, %arg4: memref<1xf32, #tpu.memory_space<smem>>, %arg5: memref<1x8x32x32xf32, #tpu.memory_space<vmem>>) attributes {dimension_semantics = [#tpu.dimension_semantics<parallel>], iteration_bounds = array<i64: 2>, scalar_prefetch = 0 : i64, scratch_operands = 0 : i64, tpu.core_type = #tpu.core_type<tc>, window_params = [{transform_indices = @transform_0, window_bounds = array<i64: 1, 8, 32, 34>}, {pipeline_mode = #tpu.pipeline_mode<synchronous>, transform_indices = @transform_1, window_bounds = array<i64: 1, 8, 1, 1>}, {pipeline_mode = #tpu.pipeline_mode<synchronous>, transform_indices = @transform_2, window_bounds = array<i64: 1, 8, 1, 1>}, {transform_indices = @transform_3, window_bounds = array<i64: 1>}, {transform_indices = @transform_4, window_bounds = array<i64: 1, 8, 32, 32>}]} {
    %c0 = arith.constant 0 : index
    %c0_0 = arith.constant 0 : index
    %c0_1 = arith.constant 0 : index
    %c0_2 = arith.constant 0 : index
    %0 = vector.load %arg1[%c0, %c0_0, %c0_1, %c0_2] : memref<1x8x32x34xbf16, #tpu.memory_space<vmem>>, vector<1x8x32x34xbf16>
    %1 = vector.shape_cast %0 : vector<1x8x32x34xbf16> to vector<8x32x34xbf16>
    %2 = arith.extf %1 : vector<8x32x34xbf16> to vector<8x32x34xf32>
    %3 = vector.extract_strided_slice %2 {offsets = [0, 0, 1], sizes = [8, 32, 32], strides = [1, 1, 1]} : vector<8x32x34xf32> to vector<8x32x32xf32>
    %c0_3 = arith.constant 0 : index
    %c0_4 = arith.constant 0 : index
    %c0_5 = arith.constant 0 : index
    %c0_6 = arith.constant 0 : index
    %4 = vector.load %arg2[%c0_3, %c0_4, %c0_5, %c0_6] : memref<1x8x1x1xf32, #tpu.memory_space<vmem>>, vector<1x8x1x1xf32>
    %5 = vector.shape_cast %4 : vector<1x8x1x1xf32> to vector<8x1x1xf32>
    %6 = vector.broadcast %5 : vector<8x1x1xf32> to vector<8x32x32xf32>
    %7 = arith.mulf %3, %6 : vector<8x32x32xf32>
    %c0_7 = arith.constant 0 : index
    %c0_8 = arith.constant 0 : index
    %c0_9 = arith.constant 0 : index
    %c0_10 = arith.constant 0 : index
    %8 = vector.load %arg3[%c0_7, %c0_8, %c0_9, %c0_10] : memref<1x8x1x1xf32, #tpu.memory_space<vmem>>, vector<1x8x1x1xf32>
    %9 = vector.shape_cast %8 : vector<1x8x1x1xf32> to vector<8x1x1xf32>
    %10 = vector.broadcast %9 : vector<8x1x1xf32> to vector<8x32x32xf32>
    %11 = arith.addf %7, %10 : vector<8x32x32xf32>
    %c0_11 = arith.constant 0 : index
    %12 = memref.load %arg4[%c0_11] : memref<1xf32, #tpu.memory_space<smem>>
    %cst = arith.constant 0.000000e+00 : f32
    %13 = vector.broadcast %cst : f32 to vector<8x32x32xf32>
    %14 = arith.maximumf %11, %13 : vector<8x32x32xf32>
    %cst_12 = arith.constant 0.000000e+00 : f32
    %15 = vector.broadcast %cst_12 : f32 to vector<8x32x32xf32>
    %16 = arith.minimumf %11, %15 : vector<8x32x32xf32>
    %17 = vector.broadcast %12 : f32 to vector<8x32x32xf32>
    %18 = arith.mulf %17, %16 : vector<8x32x32xf32>
    %19 = arith.addf %14, %18 : vector<8x32x32xf32>
    %c0_13 = arith.constant 0 : index
    %c0_14 = arith.constant 0 : index
    %c0_15 = arith.constant 0 : index
    %c0_16 = arith.constant 0 : index
    %20 = vector.load %arg5[%c0_13, %c0_14, %c0_15, %c0_16] : memref<1x8x32x32xf32, #tpu.memory_space<vmem>>, vector<1x8x32x32xf32>
    %21 = vector.shape_cast %20 : vector<1x8x32x32xf32> to vector<8x32x32xf32>
    %22 = vector.shape_cast %19 : vector<8x32x32xf32> to vector<1x8x32x32xf32>
    tpu.vector_store %arg5[%c0_13, %c0_14, %c0_15, %c0_16], %22 {strides = array<i32>} : memref<1x8x32x32xf32, #tpu.memory_space<vmem>>, vector<1x8x32x32xf32>,
    return
  }
  func.func @transform_0(%arg0: i32) -> (i32, i32, i32, i32) {
    %c0_i32 = arith.constant 0 : i32
    %c0_i32_0 = arith.constant 0 : i32
    %c0_i32_1 = arith.constant 0 : i32
    %c0_i32_2 = arith.constant 0 : i32
    return %arg0, %c0_i32, %c0_i32_0, %c0_i32_1 : i32, i32, i32, i32
  }
  func.func @transform_1(%arg0: i32) -> (i32, i32, i32, i32) {
    %c0_i32 = arith.constant 0 : i32
    %c0_i32_0 = arith.constant 0 : i32
    %c0_i32_1 = arith.constant 0 : i32
    %c0_i32_2 = arith.constant 0 : i32
    %c0_i32_3 = arith.constant 0 : i32
    return %c0_i32, %c0_i32_0, %c0_i32_1, %c0_i32_2 : i32, i32, i32, i32
  }
  func.func @transform_2(%arg0: i32) -> (i32, i32, i32, i32) {
    %c0_i32 = arith.constant 0 : i32
    %c0_i32_0 = arith.constant 0 : i32
    %c0_i32_1 = arith.constant 0 : i32
    %c0_i32_2 = arith.constant 0 : i32
    %c0_i32_3 = arith.constant 0 : i32
    return %c0_i32, %c0_i32_0, %c0_i32_1, %c0_i32_2 : i32, i32, i32, i32
  }
  func.func @transform_3(%arg0: i32) -> i32 {
    %c0_i32 = arith.constant 0 : i32
    %c0_i32_0 = arith.constant 0 : i32
    return %c0_i32 : i32
  }
  func.func @transform_4(%arg0: i32) -> (i32, i32, i32, i32) {
    %c0_i32 = arith.constant 0 : i32
    %c0_i32_0 = arith.constant 0 : i32
    %c0_i32_1 = arith.constant 0 : i32
    %c0_i32_2 = arith.constant 0 : i32
    return %arg0, %c0_i32, %c0_i32_0, %c0_i32_1 : i32, i32, i32, i32
  }
}

</mosaic_0001>

<llo_original>
// kernel: psp_upsample_forward.3
$region0: #{psp_upsample_forward.3}
  #allocation0 [shape = 'u32[]', space=smem, size = 0x4, offset = 0x4, fixed_abs, tag = 'smem constant byte address 0x4 - core index']
  #allocation1 [shape = 'u32[144,128]{1,0:T(1,128)}', space=vmem, size = 0x12000, scoped, tag = 'internal scratch']
  #allocation2 [shape = 'f32[1]{0:T(128)S(6)}', space=smem, size = 0x200, scoped, tag = 'scoped memory for psp_upsample_forward.3']
  %s0 = inlined_call_operand.vmem [shape: bf16[2,8,32,34], index: 0, kind: input, shape index: {}]
  %s1 = inlined_call_operand.vmem [shape: f32[1,8,1,1], index: 1, kind: input, shape index: {}]
  %s2 = inlined_call_operand.vmem [shape: f32[1,8,1,1], index: 2, kind: input, shape index: {}]
  %s3 = inlined_call_operand.<no memory space> [shape: f32[1], index: 3, kind: input, shape index: {}]
  %s4 = inlined_call_operand.hbm [shape: f32[2,8,32,32], index: 4, kind: output, shape index: {}]
  %s5 = sld [smem:[#allocation0]]
  $region49: #{psp_upsample_forward.3} parent=0
    _
  %s7 = ssub.s32 1, %s5
  %s8 = scalar_select 0, %s7, %s5
  %9 = sst [smem:[#allocation2]] %s3
  $region1: #{psp_upsample_forward.3} parent=0
    #allocation3 [shape = 'u8[262144]{0}', space=vmem, size = 0x40000, scoped, tag = 'output window, operand 0']
    #allocation4 [shape = 's32[2]{0}', space=sflag, size = 0x8, scoped, tag = 'scoped memory for psp_upsample_forward.3']
    %10 = vsyncpa [#allocation4], 0
    %s11 = scalar_lea.sflag [#allocation4], 1
    %12 = vsyncpa %s11, 0
    loop: start=0, step=1, limit=4
    $region2: #{psp_upsample_forward.3} parent=1 // loop_pre_header
      _
    $region3: #{psp_upsample_forward.3} parent=1 // loop_header
      %s14 = sphi 0, %s18
      %p15 = scmp.ge.s32.totalorder %s14, 4
      %s24 = sphi 0, %s26
      %s27 = sphi 0, %s24
      %s28 = sphi 0, %s27
      %s44 = sphi 0, %s28
      %s48 = sphi 0, %s48
      %s50 = sphi 0, %s48
      %s51 = sphi 0, %s50
      %s65 = sphi 0, %s51
      %s69 = sphi 0, %s69
      %s71 = sphi 0, %s69
      %s72 = sphi 0, %s71
      %s86 = sphi 0, %s72
      %s90 = sphi 0, %s90
      %s92 = sphi 0, %s90
      %s93 = sphi 0, %s92
      %s107 = sphi 0, %s93
      %s113 = sphi 0, %s115
      %s116 = sphi 0, %s113
      %s117 = sphi 0, %s116
      %s133 = sphi 0, %s117
    $region4: #{psp_upsample_forward.3} parent=1 // loop_header_branch
      %17 = sbr.rel (%p15) target = $region8
    $region5: #{psp_upsample_forward.3} parent=1 // loop_body
      %s19 = ssub.s32 %s14, 1
      %s20 = ssub.s32 %s14, 2
      %s21 = sadd.s32 %s14, 1
      %s22 = ssub.s32 %s14, %s21
      %p23 = scmp.eq.s32.totalorder %s22, 0
      %s25 = sadd.s32 %s24, 1
      %s26 = scalar_select %p23, %s24, %s25
      %p29 = pneg %p23
      %p30 = scmp.eq.s32.totalorder %s14, 1
      %p31 = por %p29, %p30
      %p32 = scmp.ne.s32.totalorder %s24, %s27
      %p33 = scmp.eq.s32.totalorder %s14, 0
      %p34 = por %p32, %p33
      %p35 = scmp.ne.s32.totalorder %s24, %s27
      %p36 = scmp.eq.s32.totalorder %s19, 1
      %p37 = por %p35, %p36
      %p38 = scmp.ne.s32.totalorder %s27, %s28
      %p39 = scmp.eq.s32.totalorder %s19, 0
      %p40 = por %p38, %p39
      %p41 = scmp.ne.s32.totalorder %s27, %s28
      %p42 = scmp.eq.s32.totalorder %s20, 1
      %p43 = por %p41, %p42
      %p45 = scmp.ne.s32.totalorder %s28, %s44
      %p46 = scmp.eq.s32.totalorder %s20, 0
      %p47 = por %p45, %p46
      %s49 = sadd.s32 %s48, 1
      %p52 = scmp.eq.s32.totalorder %s14, 1
      %p53 = scmp.ne.s32.totalorder %s48, %s50
      %p54 = scmp.eq.s32.totalorder %s14, 0
      %p55 = por %p53, %p54
      %p56 = scmp.ne.s32.totalorder %s48, %s50
      %p57 = scmp.eq.s32.totalorder %s19, 1
      %p58 = por %p56, %p57
      %p59 = scmp.ne.s32.totalorder %s50, %s51
      %p60 = scmp.eq.s32.totalorder %s19, 0
      %p61 = por %p59, %p60
      %p62 = scmp.ne.s32.totalorder %s50, %s51
      %p63 = scmp.eq.s32.totalorder %s20, 1
      %p64 = por %p62, %p63
      %p66 = scmp.ne.s32.totalorder %s51, %s65
      %p67 = scmp.eq.s32.totalorder %s20, 0
      %p68 = por %p66, %p67
      %s70 = sadd.s32 %s69, 1
      %p73 = scmp.eq.s32.totalorder %s14, 1
      %p74 = scmp.ne.s32.totalorder %s69, %s71
      %p75 = scmp.eq.s32.totalorder %s14, 0
      %p76 = por %p74, %p75
      %p77 = scmp.ne.s32.totalorder %s69, %s71
      %p78 = scmp.eq.s32.totalorder %s19, 1
      %p79 = por %p77, %p78
      %p80 = scmp.ne.s32.totalorder %s71, %s72
      %p81 = scmp.eq.s32.totalorder %s19, 0
      %p82 = por %p80, %p81
      %p83 = scmp.ne.s32.totalorder %s71, %s72
      %p84 = scmp.eq.s32.totalorder %s20, 1
      %p85 = por %p83, %p84
      %p87 = scmp.ne.s32.totalorder %s72, %s86
      %p88 = scmp.eq.s32.totalorder %s20, 0
      %p89 = por %p87, %p88
      %s91 = sadd.s32 %s90, 1
      %p94 = scmp.eq.s32.totalorder %s14, 1
      %p95 = scmp.ne.s32.totalorder %s90, %s92
      %p96 = scmp.eq.s32.totalorder %s14, 0
      %p97 = por %p95, %p96
      %p98 = scmp.ne.s32.totalorder %s90, %s92
      %p99 = scmp.eq.s32.totalorder %s19, 1
      %p100 = por %p98, %p99
      %p101 = scmp.ne.s32.totalorder %s92, %s93
      %p102 = scmp.eq.s32.totalorder %s19, 0
      %p103 = por %p101, %p102
      %p104 = scmp.ne.s32.totalorder %s92, %s93
      %p105 = scmp.eq.s32.totalorder %s20, 1
      %p106 = por %p104, %p105
      %p108 = scmp.ne.s32.totalorder %s93, %s107
      %p109 = scmp.eq.s32.totalorder %s20, 0
      %p110 = por %p108, %p109
      %s111 = ssub.s32 %s14, %s21
      %p112 = scmp.eq.s32.totalorder %s111, 0
      %s114 = sadd.s32 %s113, 1
      %s115 = scalar_select %p112, %s113, %s114
      %p118 = pneg %p112
      %p119 = scmp.eq.s32.totalorder %s14, 1
      %p120 = por %p118, %p119
      %p121 = scmp.ne.s32.totalorder %s113, %s116
      %p122 = scmp.eq.s32.totalorder %s14, 0
      %p123 = por %p121, %p122
      %p124 = scmp.ne.s32.totalorder %s113, %s116
      %p125 = scmp.eq.s32.totalorder %s19, 1
      %p126 = por %p124, %p125
      %p127 = scmp.ne.s32.totalorder %s116, %s117
      %p128 = scmp.eq.s32.totalorder %s19, 0
      %p129 = por %p127, %p128
      %p130 = scmp.ne.s32.totalorder %s116, %s117
      %p131 = scmp.eq.s32.totalorder %s20, 1
      %p132 = por %p130, %p131
      %p134 = scmp.ne.s32.totalorder %s117, %s133
      %p135 = scmp.eq.s32.totalorder %s20, 0
      %p136 = por %p134, %p135
      %p137 = scmp.le.s32.totalorder 1, %s14
      %p138 = scmp.lt.s32.totalorder %s14, 3
      %p139 = pnand %p137, %p138
      %p140 = pneg %p139
      // Predicated region
      $region9: #{psp_upsample_forward.3} parent=5 // pred_check
        _
      $region10: #{psp_upsample_forward.3} parent=5 // pred_check_branch
        %142 = sbr.rel (%p139) target = $region12
      $region11: #{psp_upsample_forward.3} parent=5 // pred_region
        %s143 = ssub.s32 %s14, 1
        // Predicated region
        $region13: #{psp_upsample_forward.3} parent=11 // pred_check
          %p144 = pneg %p61
        $region14: #{psp_upsample_forward.3} parent=11 // pred_check_branch
          %146 = sbr.rel (%p144) target = $region16
        $region15: #{psp_upsample_forward.3} parent=11 // pred_region
          _
        $region16: #{psp_upsample_forward.3} parent=11 // pred_fallthru
          _
        // Predicated region
        $region17: #{psp_upsample_forward.3} parent=11 // pred_check
          %p147 = pneg %p82
        $region18: #{psp_upsample_forward.3} parent=11 // pred_check_branch
          %149 = sbr.rel (%p147) target = $region20
        $region19: #{psp_upsample_forward.3} parent=11 // pred_region
          _
        $region20: #{psp_upsample_forward.3} parent=11 // pred_fallthru
          _
        // Predicated region
        $region21: #{psp_upsample_forward.3} parent=11 // pred_check
          %p150 = pneg %p103
        $region22: #{psp_upsample_forward.3} parent=11 // pred_check_branch
          %152 = sbr.rel (%p150) target = $region24
        $region23: #{psp_upsample_forward.3} parent=11 // pred_region
          _
        $region24: #{psp_upsample_forward.3} parent=11 // pred_fallthru
          _
      $region12: #{psp_upsample_forward.3} parent=5 // pred_fallthru
        _
      %p153 = scmp.lt.s32.totalorder %s14, 2
      // Predicated region
      $region25: #{psp_upsample_forward.3} parent=5 // pred_check
        %p154 = pneg %p153
      $region26: #{psp_upsample_forward.3} parent=5 // pred_check_branch
        %156 = sbr.rel (%p154) target = $region28
      $region27: #{psp_upsample_forward.3} parent=5 // pred_region
        // Predicated region
        $region29: #{psp_upsample_forward.3} parent=27 // pred_check
          %p157 = pneg %p34
        $region30: #{psp_upsample_forward.3} parent=27 // pred_check_branch
          %159 = sbr.rel (%p157) target = $region32
        $region31: #{psp_upsample_forward.3} parent=27 // pred_region
          %p160 = scmp.lt.s32.totalorder %s14, 1
          %s161 = scalar_select %p160, %s14, 1
          %s162 = smul.addr %s161, 32
          %s163 = smul.addr %s162, 4
          %s164 = scalar_lea.vmem %s0, %s163
        $region32: #{psp_upsample_forward.3} parent=27 // pred_fallthru
          _
      $region28: #{psp_upsample_forward.3} parent=5 // pred_fallthru
        _
      %p165 = scmp.le.s32.totalorder 1, %s14
      %p166 = scmp.lt.s32.totalorder %s14, 3
      %p167 = pnand %p165, %p166
      %p168 = pneg %p167
      // Predicated region
      $region33: #{psp_upsample_forward.3} parent=5 // pred_check
        _
      $region34: #{psp_upsample_forward.3} parent=5 // pred_check_branch
        %170 = sbr.rel (%p167) target = $region36
      $region35: #{psp_upsample_forward.3} parent=5 // pred_region
        %s171 = ssub.s32 %s14, 1
        %p172 = scmp.lt.s32.totalorder %s19, 1
        %s173 = scalar_select %p172, %s19, 1
        %s174 = smul.addr %s173, 32
        %s175 = smul.addr %s174, 4
        %s176 = scalar_lea.vmem %s0, %s175
        %p177 = pneg %p40
        %p178 = pneg %p37
        %p179 = pneg %p61
        %p180 = pneg %p58
        %p181 = pneg %p82
        %p182 = pneg %p79
        %p183 = pneg %p103
        %p184 = pneg %p100
        %p185 = pneg %p129
        %p186 = pneg %p126
        %s187 = sand.u32 %s116, 1
        %s188 = scalar_lea.sflag [#allocation4], %s187
        %s189 = sand.u32 %s116, 1
        %s190 = smul.addr %s189, 256
        %s191 = scalar_lea.vmem [#allocation3], %s190
        %p192 = scmp.lt.s32.totalorder %s19, 1
        %s193 = scalar_select %p192, %s19, 1
        %s194 = smul.addr %s193, 32
        %s195 = smul.addr %s194, 4
        %s196 = scalar_lea.vmem %s0, %s195
        %v197 = vld [vmem:[%s196] sm:$0xf]
        %v198 = vld [vmem:[%s196 + $0x4] sm:$0xf]
        %v199 = vld [vmem:[%s196 + $0x8] sm:$0xf]
        %v200 = vld [vmem:[%s196 + $0xc] sm:$0xf]
        %v201 = vld [vmem:[%s196 + $0x10] sm:$0xf]
        %v202 = vld [vmem:[%s196 + $0x14] sm:$0xf]
        %v203 = vld [vmem:[%s196 + $0x18] sm:$0xf]
        %v204 = vld [vmem:[%s196 + $0x1c] sm:$0xf]
        %v205 = vld [vmem:[%s196 + $0x20] sm:$0xf]
        %v206 = vld [vmem:[%s196 + $0x24] sm:$0xf]
        %v207 = vld [vmem:[%s196 + $0x28] sm:$0xf]
        %v208 = vld [vmem:[%s196 + $0x2c] sm:$0xf]
        %v209 = vld [vmem:[%s196 + $0x30] sm:$0xf]
        %v210 = vld [vmem:[%s196 + $0x34] sm:$0xf]
        %v211 = vld [vmem:[%s196 + $0x38] sm:$0xf]
        %v212 = vld [vmem:[%s196 + $0x3c] sm:$0xf]
        %v213 = vld [vmem:[%s196 + $0x40] sm:$0xf]
        %v214 = vld [vmem:[%s196 + $0x44] sm:$0xf]
        %v215 = vld [vmem:[%s196 + $0x48] sm:$0xf]
        %v216 = vld [vmem:[%s196 + $0x4c] sm:$0xf]
        %v217 = vld [vmem:[%s196 + $0x50] sm:$0xf]
        %v218 = vld [vmem:[%s196 + $0x54] sm:$0xf]
        %v219 = vld [vmem:[%s196 + $0x58] sm:$0xf]
        %v220 = vld [vmem:[%s196 + $0x5c] sm:$0xf]
        %v221 = vld [vmem:[%s196 + $0x60] sm:$0xf]
        %v222 = vld [vmem:[%s196 + $0x64] sm:$0xf]
        %v223 = vld [vmem:[%s196 + $0x68] sm:$0xf]
        %v224 = vld [vmem:[%s196 + $0x6c] sm:$0xf]
        %v225 = vld [vmem:[%s196 + $0x70] sm:$0xf]
        %v226 = vld [vmem:[%s196 + $0x74] sm:$0xf]
        %v227 = vld [vmem:[%s196 + $0x78] sm:$0xf]
        %v228 = vld [vmem:[%s196 + $0x7c] sm:$0xf]
        %v229 = vunpack.c.l.bf16 %v197
        %v230 = vunpack.c.l.bf16 %v198
        %v231 = vunpack.c.l.bf16 %v199
        %v232 = vunpack.c.l.bf16 %v200
        %v233 = vunpack.c.l.bf16 %v201
        %v234 = vunpack.c.l.bf16 %v202
        %v235 = vunpack.c.l.bf16 %v203
        %v236 = vunpack.c.l.bf16 %v204
        %v237 = vunpack.c.l.bf16 %v205
        %v238 = vunpack.c.l.bf16 %v206
        %v239 = vunpack.c.l.bf16 %v207
        %v240 = vunpack.c.l.bf16 %v208
        %v241 = vunpack.c.l.bf16 %v209
        %v242 = vunpack.c.l.bf16 %v210
        %v243 = vunpack.c.l.bf16 %v211
        %v244 = vunpack.c.l.bf16 %v212
        %v245 = vunpack.c.l.bf16 %v213
        %v246 = vunpack.c.l.bf16 %v214
        %v247 = vunpack.c.l.bf16 %v215
        %v248 = vunpack.c.l.bf16 %v216
        %v249 = vunpack.c.l.bf16 %v217
        %v250 = vunpack.c.l.bf16 %v218
        %v251 = vunpack.c.l.bf16 %v219
        %v252 = vunpack.c.l.bf16 %v220
        %v253 = vunpack.c.l.bf16 %v221
        %v254 = vunpack.c.l.bf16 %v222
        %v255 = vunpack.c.l.bf16 %v223
        %v256 = vunpack.c.l.bf16 %v224
        %v257 = vunpack.c.l.bf16 %v225
        %v258 = vunpack.c.l.bf16 %v226
        %v259 = vunpack.c.l.bf16 %v227
        %v260 = vunpack.c.l.bf16 %v228
        %v261 = vld [vmem:[%s1] sm:$0x1]
        %v262 = vld [vmem:[%s1 + $0x1] sm:$0x1]
        %v263 = vld [vmem:[%s1 + $0x2] sm:$0x1]
        %v264 = vld [vmem:[%s1 + $0x3] sm:$0x1]
        %v265 = vld [vmem:[%s1 + $0x4] sm:$0x1]
        %v266 = vld [vmem:[%s1 + $0x5] sm:$0x1]
        %v267 = vld [vmem:[%s1 + $0x6] sm:$0x1]
        %v268 = vld [vmem:[%s1 + $0x7] sm:$0x1]
        %v277 = vlaneseq
        %v278 = vshrl.u32 %v277, 7
        %v279 = vsub.s32 0, %v278
        %v280 = vrot.slane %v261, %v279
        %v281 = vlaneseq
        %v282 = vshrl.u32 %v281, 7
        %v283 = vsub.s32 0, %v282
        %v284 = vrot.slane %v262, %v283
        %v285 = vlaneseq
        %v286 = vshrl.u32 %v285, 7
        %v287 = vsub.s32 0, %v286
        %v288 = vrot.slane %v263, %v287
        %v289 = vlaneseq
        %v290 = vshrl.u32 %v289, 7
        %v291 = vsub.s32 0, %v290
        %v292 = vrot.slane %v264, %v291
        %v293 = vlaneseq
        %v294 = vshrl.u32 %v293, 7
        %v295 = vsub.s32 0, %v294
        %v296 = vrot.slane %v265, %v295
        %v297 = vlaneseq
        %v298 = vshrl.u32 %v297, 7
        %v299 = vsub.s32 0, %v298
        %v300 = vrot.slane %v266, %v299
        %v301 = vlaneseq
        %v302 = vshrl.u32 %v301, 7
        %v303 = vsub.s32 0, %v302
        %v304 = vrot.slane %v267, %v303
        %v305 = vlaneseq
        %v306 = vshrl.u32 %v305, 7
        %v307 = vsub.s32 0, %v306
        %v308 = vrot.slane %v268, %v307
        %309 = vset.pattern.permute.xlu0 0
        %310 = vperm.xlu0 %309, %v280
        %v311 = vpop.permute.xlu0 %310
        %313 = vset.pattern.permute.xlu0 0
        %314 = vperm.xlu0 %313, %v284
        %v315 = vpop.permute.xlu0 %314
        %317 = vset.pattern.permute.xlu0 0
        %318 = vperm.xlu0 %317, %v288
        %v319 = vpop.permute.xlu0 %318
        %321 = vset.pattern.permute.xlu0 0
        %322 = vperm.xlu0 %321, %v292
        %v323 = vpop.permute.xlu0 %322
        %325 = vset.pattern.permute.xlu0 0
        %326 = vperm.xlu0 %325, %v296
        %v327 = vpop.permute.xlu0 %326
        %329 = vset.pattern.permute.xlu0 0
        %330 = vperm.xlu0 %329, %v300
        %v331 = vpop.permute.xlu0 %330
        %333 = vset.pattern.permute.xlu0 0
        %334 = vperm.xlu0 %333, %v304
        %v335 = vpop.permute.xlu0 %334
        %337 = vset.pattern.permute.xlu0 0
        %338 = vperm.xlu0 %337, %v308
        %v339 = vpop.permute.xlu0 %338
        %v341 = vmul.f32 %v229, %v311
        %v342 = vmul.f32 %v230, %v311
        %v343 = vmul.f32 %v231, %v311
        %v344 = vmul.f32 %v232, %v311
        %v345 = vmul.f32 %v233, %v315
        %v346 = vmul.f32 %v234, %v315
        %v347 = vmul.f32 %v235, %v315
        %v348 = vmul.f32 %v236, %v315
        %v349 = vmul.f32 %v237, %v319
        %v350 = vmul.f32 %v238, %v319
        %v351 = vmul.f32 %v239, %v319
        %v352 = vmul.f32 %v240, %v319
        %v353 = vmul.f32 %v241, %v323
        %v354 = vmul.f32 %v242, %v323
        %v355 = vmul.f32 %v243, %v323
        %v356 = vmul.f32 %v244, %v323
        %v357 = vmul.f32 %v245, %v327
        %v358 = vmul.f32 %v246, %v327
        %v359 = vmul.f32 %v247, %v327
        %v360 = vmul.f32 %v248, %v327
        %v361 = vmul.f32 %v249, %v331
        %v362 = vmul.f32 %v250, %v331
        %v363 = vmul.f32 %v251, %v331
        %v364 = vmul.f32 %v252, %v331
        %v365 = vmul.f32 %v253, %v335
        %v366 = vmul.f32 %v254, %v335
        %v367 = vmul.f32 %v255, %v335
        %v368 = vmul.f32 %v256, %v335
        %v369 = vmul.f32 %v257, %v339
        %v370 = vmul.f32 %v258, %v339
        %v371 = vmul.f32 %v259, %v339
        %v372 = vmul.f32 %v260, %v339
        %v373 = vld [vmem:[%s2] sm:$0x1]
        %v374 = vld [vmem:[%s2 + $0x1] sm:$0x1]
        %v375 = vld [vmem:[%s2 + $0x2] sm:$0x1]
        %v376 = vld [vmem:[%s2 + $0x3] sm:$0x1]
        %v377 = vld [vmem:[%s2 + $0x4] sm:$0x1]
        %v378 = vld [vmem:[%s2 + $0x5] sm:$0x1]
        %v379 = vld [vmem:[%s2 + $0x6] sm:$0x1]
        %v380 = vld [vmem:[%s2 + $0x7] sm:$0x1]
        %v389 = vlaneseq
        %v390 = vshrl.u32 %v389, 7
        %v391 = vsub.s32 0, %v390
        %v392 = vrot.slane %v373, %v391
        %v393 = vlaneseq
        %v394 = vshrl.u32 %v393, 7
        %v395 = vsub.s32 0, %v394
        %v396 = vrot.slane %v374, %v395
        %v397 = vlaneseq
        %v398 = vshrl.u32 %v397, 7
        %v399 = vsub.s32 0, %v398
        %v400 = vrot.slane %v375, %v399
        %v401 = vlaneseq
        %v402 = vshrl.u32 %v401, 7
        %v403 = vsub.s32 0, %v402
        %v404 = vrot.slane %v376, %v403
        %v405 = vlaneseq
        %v406 = vshrl.u32 %v405, 7
        %v407 = vsub.s32 0, %v406
        %v408 = vrot.slane %v377, %v407
        %v409 = vlaneseq
        %v410 = vshrl.u32 %v409, 7
        %v411 = vsub.s32 0, %v410
        %v412 = vrot.slane %v378, %v411
        %v413 = vlaneseq
        %v414 = vshrl.u32 %v413, 7
        %v415 = vsub.s32 0, %v414
        %v416 = vrot.slane %v379, %v415
        %v417 = vlaneseq
        %v418 = vshrl.u32 %v417, 7
        %v419 = vsub.s32 0, %v418
        %v420 = vrot.slane %v380, %v419
        %421 = vset.pattern.permute.xlu0 0
        %422 = vperm.xlu0 %421, %v392
        %v423 = vpop.permute.xlu0 %422
        %425 = vset.pattern.permute.xlu0 0
        %426 = vperm.xlu0 %425, %v396
        %v427 = vpop.permute.xlu0 %426
        %429 = vset.pattern.permute.xlu0 0
        %430 = vperm.xlu0 %429, %v400
        %v431 = vpop.permute.xlu0 %430
        %433 = vset.pattern.permute.xlu0 0
        %434 = vperm.xlu0 %433, %v404
        %v435 = vpop.permute.xlu0 %434
        %437 = vset.pattern.permute.xlu0 0
        %438 = vperm.xlu0 %437, %v408
        %v439 = vpop.permute.xlu0 %438
        %441 = vset.pattern.permute.xlu0 0
        %442 = vperm.xlu0 %441, %v412
        %v443 = vpop.permute.xlu0 %442
        %445 = vset.pattern.permute.xlu0 0
        %446 = vperm.xlu0 %445, %v416
        %v447 = vpop.permute.xlu0 %446
        %449 = vset.pattern.permute.xlu0 0
        %450 = vperm.xlu0 %449, %v420
        %v451 = vpop.permute.xlu0 %450
        %v453 = vadd.f32 %v341, %v423
        %v454 = vadd.f32 %v342, %v423
        %v455 = vadd.f32 %v343, %v423
        %v456 = vadd.f32 %v344, %v423
        %v457 = vadd.f32 %v345, %v427
        %v458 = vadd.f32 %v346, %v427
        %v459 = vadd.f32 %v347, %v427
        %v460 = vadd.f32 %v348, %v427
        %v461 = vadd.f32 %v349, %v431
        %v462 = vadd.f32 %v350, %v431
        %v463 = vadd.f32 %v351, %v431
        %v464 = vadd.f32 %v352, %v431
        %v465 = vadd.f32 %v353, %v435
        %v466 = vadd.f32 %v354, %v435
        %v467 = vadd.f32 %v355, %v435
        %v468 = vadd.f32 %v356, %v435
        %v469 = vadd.f32 %v357, %v439
        %v470 = vadd.f32 %v358, %v439
        %v471 = vadd.f32 %v359, %v439
        %v472 = vadd.f32 %v360, %v439
        %v473 = vadd.f32 %v361, %v443
        %v474 = vadd.f32 %v362, %v443
        %v475 = vadd.f32 %v363, %v443
        %v476 = vadd.f32 %v364, %v443
        %v477 = vadd.f32 %v365, %v447
        %v478 = vadd.f32 %v366, %v447
        %v479 = vadd.f32 %v367, %v447
        %v480 = vadd.f32 %v368, %v447
        %v481 = vadd.f32 %v369, %v451
        %v482 = vadd.f32 %v370, %v451
        %v483 = vadd.f32 %v371, %v451
        %v484 = vadd.f32 %v372, %v451
        %s485 = sld [smem:[#allocation2]]
        %v486 = vmax.f32 %v453, 0.0
        %v487 = vmax.f32 %v454, 0.0
        %v488 = vmax.f32 %v455, 0.0
        %v489 = vmax.f32 %v456, 0.0
        %v490 = vmax.f32 %v457, 0.0
        %v491 = vmax.f32 %v458, 0.0
        %v492 = vmax.f32 %v459, 0.0
        %v493 = vmax.f32 %v460, 0.0
        %v494 = vmax.f32 %v461, 0.0
        %v495 = vmax.f32 %v462, 0.0
        %v496 = vmax.f32 %v463, 0.0
        %v497 = vmax.f32 %v464, 0.0
        %v498 = vmax.f32 %v465, 0.0
        %v499 = vmax.f32 %v466, 0.0
        %v500 = vmax.f32 %v467, 0.0
        %v501 = vmax.f32 %v468, 0.0
        %v502 = vmax.f32 %v469, 0.0
        %v503 = vmax.f32 %v470, 0.0
        %v504 = vmax.f32 %v471, 0.0
        %v505 = vmax.f32 %v472, 0.0
        %v506 = vmax.f32 %v473, 0.0
        %v507 = vmax.f32 %v474, 0.0
        %v508 = vmax.f32 %v475, 0.0
        %v509 = vmax.f32 %v476, 0.0
        %v510 = vmax.f32 %v477, 0.0
        %v511 = vmax.f32 %v478, 0.0
        %v512 = vmax.f32 %v479, 0.0
        %v513 = vmax.f32 %v480, 0.0
        %v514 = vmax.f32 %v481, 0.0
        %v515 = vmax.f32 %v482, 0.0
        %v516 = vmax.f32 %v483, 0.0
        %v517 = vmax.f32 %v484, 0.0
        %v518 = vmin.f32 %v453, 0.0
        %v519 = vmin.f32 %v454, 0.0
        %v520 = vmin.f32 %v455, 0.0
        %v521 = vmin.f32 %v456, 0.0
        %v522 = vmin.f32 %v457, 0.0
        %v523 = vmin.f32 %v458, 0.0
        %v524 = vmin.f32 %v459, 0.0
        %v525 = vmin.f32 %v460, 0.0
        %v526 = vmin.f32 %v461, 0.0
        %v527 = vmin.f32 %v462, 0.0
        %v528 = vmin.f32 %v463, 0.0
        %v529 = vmin.f32 %v464, 0.0
        %v530 = vmin.f32 %v465, 0.0
        %v531 = vmin.f32 %v466, 0.0
        %v532 = vmin.f32 %v467, 0.0
        %v533 = vmin.f32 %v468, 0.0
        %v534 = vmin.f32 %v469, 0.0
        %v535 = vmin.f32 %v470, 0.0
        %v536 = vmin.f32 %v471, 0.0
        %v537 = vmin.f32 %v472, 0.0
        %v538 = vmin.f32 %v473, 0.0
        %v539 = vmin.f32 %v474, 0.0
        %v540 = vmin.f32 %v475, 0.0
        %v541 = vmin.f32 %v476, 0.0
        %v542 = vmin.f32 %v477, 0.0
        %v543 = vmin.f32 %v478, 0.0
        %v544 = vmin.f32 %v479, 0.0
        %v545 = vmin.f32 %v480, 0.0
        %v546 = vmin.f32 %v481, 0.0
        %v547 = vmin.f32 %v482, 0.0
        %v548 = vmin.f32 %v483, 0.0
        %v549 = vmin.f32 %v484, 0.0
        %v550 = vstv %s485
        %v551 = vmul.f32 %v550, %v518
        %v552 = vmul.f32 %v550, %v519
        %v553 = vmul.f32 %v550, %v520
        %v554 = vmul.f32 %v550, %v521
        %v555 = vmul.f32 %v550, %v522
        %v556 = vmul.f32 %v550, %v523
        %v557 = vmul.f32 %v550, %v524
        %v558 = vmul.f32 %v550, %v525
        %v559 = vmul.f32 %v550, %v526
        %v560 = vmul.f32 %v550, %v527
        %v561 = vmul.f32 %v550, %v528
        %v562 = vmul.f32 %v550, %v529
        %v563 = vmul.f32 %v550, %v530
        %v564 = vmul.f32 %v550, %v531
        %v565 = vmul.f32 %v550, %v532
        %v566 = vmul.f32 %v550, %v533
        %v567 = vmul.f32 %v550, %v534
        %v568 = vmul.f32 %v550, %v535
        %v569 = vmul.f32 %v550, %v536
        %v570 = vmul.f32 %v550, %v537
        %v571 = vmul.f32 %v550, %v538
        %v572 = vmul.f32 %v550, %v539
        %v573 = vmul.f32 %v550, %v540
        %v574 = vmul.f32 %v550, %v541
        %v575 = vmul.f32 %v550, %v542
        %v576 = vmul.f32 %v550, %v543
        %v577 = vmul.f32 %v550, %v544
        %v578 = vmul.f32 %v550, %v545
        %v579 = vmul.f32 %v550, %v546
        %v580 = vmul.f32 %v550, %v547
        %v581 = vmul.f32 %v550, %v548
        %v582 = vmul.f32 %v550, %v549
        %v583 = vadd.f32 %v486, %v551
        %v584 = vadd.f32 %v487, %v552
        %v585 = vadd.f32 %v488, %v553
        %v586 = vadd.f32 %v489, %v554
        %v587 = vadd.f32 %v490, %v555
        %v588 = vadd.f32 %v491, %v556
        %v589 = vadd.f32 %v492, %v557
        %v590 = vadd.f32 %v493, %v558
        %v591 = vadd.f32 %v494, %v559
        %v592 = vadd.f32 %v495, %v560
        %v593 = vadd.f32 %v496, %v561
        %v594 = vadd.f32 %v497, %v562
        %v595 = vadd.f32 %v498, %v563
        %v596 = vadd.f32 %v499, %v564
        %v597 = vadd.f32 %v500, %v565
        %v598 = vadd.f32 %v501, %v566
        %v599 = vadd.f32 %v502, %v567
        %v600 = vadd.f32 %v503, %v568
        %v601 = vadd.f32 %v504, %v569
        %v602 = vadd.f32 %v505, %v570
        %v603 = vadd.f32 %v506, %v571
        %v604 = vadd.f32 %v507, %v572
        %v605 = vadd.f32 %v508, %v573
        %v606 = vadd.f32 %v509, %v574
        %v607 = vadd.f32 %v510, %v575
        %v608 = vadd.f32 %v511, %v576
        %v609 = vadd.f32 %v512, %v577
        %v610 = vadd.f32 %v513, %v578
        %v611 = vadd.f32 %v514, %v579
        %v612 = vadd.f32 %v515, %v580
        %v613 = vadd.f32 %v516, %v581
        %v614 = vadd.f32 %v517, %v582
        %647 = vrot.lane.b32.xlu0 %v583, 127
        %v648 = vpop.permute.xlu0 %647
        %649 = vrot.lane.b32.xlu0 %v584, 127
        %v650 = vpop.permute.xlu0 %649
        %651 = vrot.lane.b32.xlu0 %v585, 127
        %v652 = vpop.permute.xlu0 %651
        %653 = vrot.lane.b32.xlu0 %v586, 127
        %v654 = vpop.permute.xlu0 %653
        %655 = vrot.lane.b32.xlu0 %v587, 127
        %v656 = vpop.permute.xlu0 %655
        %657 = vrot.lane.b32.xlu0 %v588, 127
        %v658 = vpop.permute.xlu0 %657
        %659 = vrot.lane.b32.xlu0 %v589, 127
        %v660 = vpop.permute.xlu0 %659
        %661 = vrot.lane.b32.xlu0 %v590, 127
        %v662 = vpop.permute.xlu0 %661
        %663 = vrot.lane.b32.xlu0 %v591, 127
        %v664 = vpop.permute.xlu0 %663
        %665 = vrot.lane.b32.xlu0 %v592, 127
        %v666 = vpop.permute.xlu0 %665
        %667 = vrot.lane.b32.xlu0 %v593, 127
        %v668 = vpop.permute.xlu0 %667
        %669 = vrot.lane.b32.xlu0 %v594, 127
        %v670 = vpop.permute.xlu0 %669
        %671 = vrot.lane.b32.xlu0 %v595, 127
        %v672 = vpop.permute.xlu0 %671
        %673 = vrot.lane.b32.xlu0 %v596, 127
        %v674 = vpop.permute.xlu0 %673
        %675 = vrot.lane.b32.xlu0 %v597, 127
        %v676 = vpop.permute.xlu0 %675
        %677 = vrot.lane.b32.xlu0 %v598, 127
        %v678 = vpop.permute.xlu0 %677
        %679 = vrot.lane.b32.xlu0 %v599, 127
        %v680 = vpop.permute.xlu0 %679
        %681 = vrot.lane.b32.xlu0 %v600, 127
        %v682 = vpop.permute.xlu0 %681
        %683 = vrot.lane.b32.xlu0 %v601, 127
        %v684 = vpop.permute.xlu0 %683
        %685 = vrot.lane.b32.xlu0 %v602, 127
        %v686 = vpop.permute.xlu0 %685
        %687 = vrot.lane.b32.xlu0 %v603, 127
        %v688 = vpop.permute.xlu0 %687
        %689 = vrot.lane.b32.xlu0 %v604, 127
        %v690 = vpop.permute.xlu0 %689
        %691 = vrot.lane.b32.xlu0 %v605, 127
        %v692 = vpop.permute.xlu0 %691
        %693 = vrot.lane.b32.xlu0 %v606, 127
        %v694 = vpop.permute.xlu0 %693
        %695 = vrot.lane.b32.xlu0 %v607, 127
        %v696 = vpop.permute.xlu0 %695
        %697 = vrot.lane.b32.xlu0 %v608, 127
        %v698 = vpop.permute.xlu0 %697
        %699 = vrot.lane.b32.xlu0 %v609, 127
        %v700 = vpop.permute.xlu0 %699
        %701 = vrot.lane.b32.xlu0 %v610, 127
        %v702 = vpop.permute.xlu0 %701
        %703 = vrot.lane.b32.xlu0 %v611, 127
        %v704 = vpop.permute.xlu0 %703
        %705 = vrot.lane.b32.xlu0 %v612, 127
        %v706 = vpop.permute.xlu0 %705
        %707 = vrot.lane.b32.xlu0 %v613, 127
        %v708 = vpop.permute.xlu0 %707
        %709 = vrot.lane.b32.xlu0 %v614, 127
        %v710 = vpop.permute.xlu0 %709
        %vm743 = vcmask 261120
        %744 = vst.msk [vmem:[%s191] sm:$0xff] %vm743, %v648
        %745 = vst.msk [vmem:[%s191 + $0x8] sm:$0xff] %vm743, %v650
        %746 = vst.msk [vmem:[%s191 + $0x10] sm:$0xff] %vm743, %v652
        %747 = vst.msk [vmem:[%s191 + $0x18] sm:$0xff] %vm743, %v654
        %748 = vst.msk [vmem:[%s191 + $0x20] sm:$0xff] %vm743, %v656
        %749 = vst.msk [vmem:[%s191 + $0x28] sm:$0xff] %vm743, %v658
        %750 = vst.msk [vmem:[%s191 + $0x30] sm:$0xff] %vm743, %v660
        %751 = vst.msk [vmem:[%s191 + $0x38] sm:$0xff] %vm743, %v662
        %752 = vst.msk [vmem:[%s191 + $0x40] sm:$0xff] %vm743, %v664
        %753 = vst.msk [vmem:[%s191 + $0x48] sm:$0xff] %vm743, %v666
        %754 = vst.msk [vmem:[%s191 + $0x50] sm:$0xff] %vm743, %v668
        %755 = vst.msk [vmem:[%s191 + $0x58] sm:$0xff] %vm743, %v670
        %756 = vst.msk [vmem:[%s191 + $0x60] sm:$0xff] %vm743, %v672
        %757 = vst.msk [vmem:[%s191 + $0x68] sm:$0xff] %vm743, %v674
        %758 = vst.msk [vmem:[%s191 + $0x70] sm:$0xff] %vm743, %v676
        %759 = vst.msk [vmem:[%s191 + $0x78] sm:$0xff] %vm743, %v678
        %760 = vst.msk [vmem:[%s191 + $0x80] sm:$0xff] %vm743, %v680
        %761 = vst.msk [vmem:[%s191 + $0x88] sm:$0xff] %vm743, %v682
        %762 = vst.msk [vmem:[%s191 + $0x90] sm:$0xff] %vm743, %v684
        %763 = vst.msk [vmem:[%s191 + $0x98] sm:$0xff] %vm743, %v686
        %764 = vst.msk [vmem:[%s191 + $0xa0] sm:$0xff] %vm743, %v688
        %765 = vst.msk [vmem:[%s191 + $0xa8] sm:$0xff] %vm743, %v690
        %766 = vst.msk [vmem:[%s191 + $0xb0] sm:$0xff] %vm743, %v692
        %767 = vst.msk [vmem:[%s191 + $0xb8] sm:$0xff] %vm743, %v694
        %768 = vst.msk [vmem:[%s191 + $0xc0] sm:$0xff] %vm743, %v696
        %769 = vst.msk [vmem:[%s191 + $0xc8] sm:$0xff] %vm743, %v698
        %770 = vst.msk [vmem:[%s191 + $0xd0] sm:$0xff] %vm743, %v700
        %771 = vst.msk [vmem:[%s191 + $0xd8] sm:$0xff] %vm743, %v702
        %772 = vst.msk [vmem:[%s191 + $0xe0] sm:$0xff] %vm743, %v704
        %773 = vst.msk [vmem:[%s191 + $0xe8] sm:$0xff] %vm743, %v706
        %774 = vst.msk [vmem:[%s191 + $0xf0] sm:$0xff] %vm743, %v708
        %775 = vst.msk [vmem:[%s191 + $0xf8] sm:$0xff] %vm743, %v710
        %s776 = sand.u32 %s116, 1
        %s777 = scalar_lea.sflag [#allocation4], %s776
        %s778 = sand.u32 %s116, 1
        %s779 = smul.addr %s778, 256
        %s780 = scalar_lea.vmem [#allocation3], %s779
        // Predicated region
        $region37: #{psp_upsample_forward.3} parent=35 // pred_check
          %p781 = pneg %p126
        $region38: #{psp_upsample_forward.3} parent=35 // pred_check_branch
          %783 = sbr.rel (%p781) target = $region40
        $region39: #{psp_upsample_forward.3} parent=35 // pred_region
          %s785 = ssub.s32 4096, 4096
          %786 = vsyncadd %s777, %s785
          %s787 = smul.addr %s19, 32
          %s788 = smul.addr %s787, 128
          %s789 = scalar_lea.hbm %s4, %s788
          %s790 = sshll.u32 %s780, 4
          %s791 = int_to_ptr.vmem [resolvable:$true] %s790
          %796 = dma.vmem_to_hbm [thread:$0]  %s791, 4096, %s789, %s777, 128, 128, 8
        $region40: #{psp_upsample_forward.3} parent=35 // pred_fallthru
          _
      $region36: #{psp_upsample_forward.3} parent=5 // pred_fallthru
        _
      %p797 = scmp.le.s32.totalorder 2, %s14
      // Predicated region
      $region41: #{psp_upsample_forward.3} parent=5 // pred_check
        %p798 = pneg %p797
      $region42: #{psp_upsample_forward.3} parent=5 // pred_check_branch
        %800 = sbr.rel (%p798) target = $region44
      $region43: #{psp_upsample_forward.3} parent=5 // pred_region
        %s801 = ssub.s32 %s14, 2
        // Predicated region
        $region45: #{psp_upsample_forward.3} parent=43 // pred_check
          %p802 = pneg %p132
        $region46: #{psp_upsample_forward.3} parent=43 // pred_check_branch
          %804 = sbr.rel (%p802) target = $region48
        $region47: #{psp_upsample_forward.3} parent=43 // pred_region
          %s805 = sand.u32 %s117, 1
          %s806 = scalar_lea.sflag [#allocation4], %s805
          %s807 = sand.u32 %s117, 1
          %s808 = smul.addr %s807, 256
          %s809 = scalar_lea.vmem [#allocation3], %s808
          %810 = dma.done %s806, 4096
        $region48: #{psp_upsample_forward.3} parent=43 // pred_fallthru
          _
      $region44: #{psp_upsample_forward.3} parent=5 // pred_fallthru
        _
    $region6: #{psp_upsample_forward.3} parent=1 // loop_footer
      %s18 = sadd.s32 1, %s14
    $region7: #{psp_upsample_forward.3} parent=1 // loop_footer_branch
      %13 = sbr.rel target = $region3
    $region8: #{psp_upsample_forward.3} parent=1 // loop_exit
      _
    %811 = vsyncpa [#allocation4], 1
    %s812 = scalar_lea.sflag [#allocation4], 1
    %813 = vsyncpa %s812, 1

// kernel: psp_upsample_forward.2
$region0: #{psp_upsample_forward.2}
  #allocation0 [shape = 'u32[]', space=smem, size = 0x4, offset = 0x4, fixed_abs, tag = 'smem constant byte address 0x4 - core index']
  #allocation1 [shape = 'u32[144,128]{1,0:T(1,128)}', space=vmem, size = 0x12000, scoped, tag = 'internal scratch']
  #allocation2 [shape = 'bf16[72,1088]{1,0:T(8,128)(2,1)}', space=vmem, size = 0x28800, scoped, tag = 'scratch operand']
  %s0 = inlined_call_operand.vmem [shape: bf16[2,8,1158], index: 0, kind: input, shape index: {}]
  %s1 = inlined_call_operand.vmem [shape: bf16[8,72], index: 1, kind: input, shape index: {}]
  %s2 = inlined_call_operand.vmem [shape: f32[1,1088], index: 2, kind: input, shape index: {}]
  %s3 = inlined_call_operand.vmem [shape: bf16[2,8,1088], index: 3, kind: output, shape index: {0}]
  %s4 = inlined_call_operand.vmem [shape: f32[2,8,2], index: 4, kind: output, shape index: {1}]
  %5 = xla_tuple %s3, %s4
  %s6 = sld [smem:[#allocation0]]
  $region53: #{psp_upsample_forward.2} parent=0
    _
  %s8 = ssub.s32 1, %s6
  %s9 = scalar_select 0, %s8, %s6
  loop: start=0, step=1, limit=4
  $region2: #{psp_upsample_forward.2} parent=0 // loop_pre_header
    _
  $region3: #{psp_upsample_forward.2} parent=0 // loop_header
    %s11 = sphi 0, %s15
    %p12 = scmp.ge.s32.totalorder %s11, 4
    %s21 = sphi 0, %s23
    %s24 = sphi 0, %s21
    %s25 = sphi 0, %s24
    %s41 = sphi 0, %s25
    %s45 = sphi 0, %s45
    %s47 = sphi 0, %s45
    %s48 = sphi 0, %s47
    %s62 = sphi 0, %s48
    %s66 = sphi 0, %s66
    %s68 = sphi 0, %s66
    %s69 = sphi 0, %s68
    %s83 = sphi 0, %s69
    %s89 = sphi 0, %s91
    %s92 = sphi 0, %s89
    %s93 = sphi 0, %s92
    %s109 = sphi 0, %s93
    %s115 = sphi 0, %s117
    %s118 = sphi 0, %s115
    %s119 = sphi 0, %s118
    %s135 = sphi 0, %s119
  $region4: #{psp_upsample_forward.2} parent=0 // loop_header_branch
    %14 = sbr.rel (%p12) target = $region8
  $region5: #{psp_upsample_forward.2} parent=0 // loop_body
    %s16 = ssub.s32 %s11, 1
    %s17 = ssub.s32 %s11, 2
    %s18 = sadd.s32 %s11, 1
    %s19 = ssub.s32 %s11, %s18
    %p20 = scmp.eq.s32.totalorder %s19, 0
    %s22 = sadd.s32 %s21, 1
    %s23 = scalar_select %p20, %s21, %s22
    %p26 = pneg %p20
    %p27 = scmp.eq.s32.totalorder %s11, 1
    %p28 = por %p26, %p27
    %p29 = scmp.ne.s32.totalorder %s21, %s24
    %p30 = scmp.eq.s32.totalorder %s11, 0
    %p31 = por %p29, %p30
    %p32 = scmp.ne.s32.totalorder %s21, %s24
    %p33 = scmp.eq.s32.totalorder %s16, 1
    %p34 = por %p32, %p33
    %p35 = scmp.ne.s32.totalorder %s24, %s25
    %p36 = scmp.eq.s32.totalorder %s16, 0
    %p37 = por %p35, %p36
    %p38 = scmp.ne.s32.totalorder %s24, %s25
    %p39 = scmp.eq.s32.totalorder %s17, 1
    %p40 = por %p38, %p39
    %p42 = scmp.ne.s32.totalorder %s25, %s41
    %p43 = scmp.eq.s32.totalorder %s17, 0
    %p44 = por %p42, %p43
    %s46 = sadd.s32 %s45, 1
    %p49 = scmp.eq.s32.totalorder %s11, 1
    %p50 = scmp.ne.s32.totalorder %s45, %s47
    %p51 = scmp.eq.s32.totalorder %s11, 0
    %p52 = por %p50, %p51
    %p53 = scmp.ne.s32.totalorder %s45, %s47
    %p54 = scmp.eq.s32.totalorder %s16, 1
    %p55 = por %p53, %p54
    %p56 = scmp.ne.s32.totalorder %s47, %s48
    %p57 = scmp.eq.s32.totalorder %s16, 0
    %p58 = por %p56, %p57
    %p59 = scmp.ne.s32.totalorder %s47, %s48
    %p60 = scmp.eq.s32.totalorder %s17, 1
    %p61 = por %p59, %p60
    %p63 = scmp.ne.s32.totalorder %s48, %s62
    %p64 = scmp.eq.s32.totalorder %s17, 0
    %p65 = por %p63, %p64
    %s67 = sadd.s32 %s66, 1
    %p70 = scmp.eq.s32.totalorder %s11, 1
    %p71 = scmp.ne.s32.totalorder %s66, %s68
    %p72 = scmp.eq.s32.totalorder %s11, 0
    %p73 = por %p71, %p72
    %p74 = scmp.ne.s32.totalorder %s66, %s68
    %p75 = scmp.eq.s32.totalorder %s16, 1
    %p76 = por %p74, %p75
    %p77 = scmp.ne.s32.totalorder %s68, %s69
    %p78 = scmp.eq.s32.totalorder %s16, 0
    %p79 = por %p77, %p78
    %p80 = scmp.ne.s32.totalorder %s68, %s69
    %p81 = scmp.eq.s32.totalorder %s17, 1
    %p82 = por %p80, %p81
    %p84 = scmp.ne.s32.totalorder %s69, %s83
    %p85 = scmp.eq.s32.totalorder %s17, 0
    %p86 = por %p84, %p85
    %s87 = ssub.s32 %s11, %s18
    %p88 = scmp.eq.s32.totalorder %s87, 0
    %s90 = sadd.s32 %s89, 1
    %s91 = scalar_select %p88, %s89, %s90
    %p94 = pneg %p88
    %p95 = scmp.eq.s32.totalorder %s11, 1
    %p96 = por %p94, %p95
    %p97 = scmp.ne.s32.totalorder %s89, %s92
    %p98 = scmp.eq.s32.totalorder %s11, 0
    %p99 = por %p97, %p98
    %p100 = scmp.ne.s32.totalorder %s89, %s92
    %p101 = scmp.eq.s32.totalorder %s16, 1
    %p102 = por %p100, %p101
    %p103 = scmp.ne.s32.totalorder %s92, %s93
    %p104 = scmp.eq.s32.totalorder %s16, 0
    %p105 = por %p103, %p104
    %p106 = scmp.ne.s32.totalorder %s92, %s93
    %p107 = scmp.eq.s32.totalorder %s17, 1
    %p108 = por %p106, %p107
    %p110 = scmp.ne.s32.totalorder %s93, %s109
    %p111 = scmp.eq.s32.totalorder %s17, 0
    %p112 = por %p110, %p111
    %s113 = ssub.s32 %s11, %s18
    %p114 = scmp.eq.s32.totalorder %s113, 0
    %s116 = sadd.s32 %s115, 1
    %s117 = scalar_select %p114, %s115, %s116
    %p120 = pneg %p114
    %p121 = scmp.eq.s32.totalorder %s11, 1
    %p122 = por %p120, %p121
    %p123 = scmp.ne.s32.totalorder %s115, %s118
    %p124 = scmp.eq.s32.totalorder %s11, 0
    %p125 = por %p123, %p124
    %p126 = scmp.ne.s32.totalorder %s115, %s118
    %p127 = scmp.eq.s32.totalorder %s16, 1
    %p128 = por %p126, %p127
    %p129 = scmp.ne.s32.totalorder %s118, %s119
    %p130 = scmp.eq.s32.totalorder %s16, 0
    %p131 = por %p129, %p130
    %p132 = scmp.ne.s32.totalorder %s118, %s119
    %p133 = scmp.eq.s32.totalorder %s17, 1
    %p134 = por %p132, %p133
    %p136 = scmp.ne.s32.totalorder %s119, %s135
    %p137 = scmp.eq.s32.totalorder %s17, 0
    %p138 = por %p136, %p137
    %p139 = scmp.le.s32.totalorder 1, %s11
    %p140 = scmp.lt.s32.totalorder %s11, 3
    %p141 = pnand %p139, %p140
    %p142 = pneg %p141
    // Predicated region
    $region9: #{psp_upsample_forward.2} parent=5 // pred_check
      _
    $region10: #{psp_upsample_forward.2} parent=5 // pred_check_branch
      %144 = sbr.rel (%p141) target = $region12
    $region11: #{psp_upsample_forward.2} parent=5 // pred_region
      %s145 = ssub.s32 %s11, 1
      // Predicated region
      $region13: #{psp_upsample_forward.2} parent=11 // pred_check
        %p146 = pneg %p58
      $region14: #{psp_upsample_forward.2} parent=11 // pred_check_branch
        %148 = sbr.rel (%p146) target = $region16
      $region15: #{psp_upsample_forward.2} parent=11 // pred_region
        _
      $region16: #{psp_upsample_forward.2} parent=11 // pred_fallthru
        _
      // Predicated region
      $region17: #{psp_upsample_forward.2} parent=11 // pred_check
        %p149 = pneg %p79
      $region18: #{psp_upsample_forward.2} parent=11 // pred_check_branch
        %151 = sbr.rel (%p149) target = $region20
      $region19: #{psp_upsample_forward.2} parent=11 // pred_region
        _
      $region20: #{psp_upsample_forward.2} parent=11 // pred_fallthru
        _
    $region12: #{psp_upsample_forward.2} parent=5 // pred_fallthru
      _
    %p152 = scmp.lt.s32.totalorder %s11, 2
    // Predicated region
    $region21: #{psp_upsample_forward.2} parent=5 // pred_check
      %p153 = pneg %p152
    $region22: #{psp_upsample_forward.2} parent=5 // pred_check_branch
      %155 = sbr.rel (%p153) target = $region24
    $region23: #{psp_upsample_forward.2} parent=5 // pred_region
      // Predicated region
      $region25: #{psp_upsample_forward.2} parent=23 // pred_check
        %p156 = pneg %p31
      $region26: #{psp_upsample_forward.2} parent=23 // pred_check_branch
        %158 = sbr.rel (%p156) target = $region28
      $region27: #{psp_upsample_forward.2} parent=23 // pred_region
        %p159 = scmp.lt.s32.totalorder %s11, 1
        %s160 = scalar_select %p159, %s11, 1
        %s161 = smul.addr %s160, 10
        %s162 = smul.addr %s161, 4
        %s163 = scalar_lea.vmem %s0, %s162
      $region28: #{psp_upsample_forward.2} parent=23 // pred_fallthru
        _
    $region24: #{psp_upsample_forward.2} parent=5 // pred_fallthru
      _
    %p164 = scmp.le.s32.totalorder 1, %s11
    %p165 = scmp.lt.s32.totalorder %s11, 3
    %p166 = pnand %p164, %p165
    %p167 = pneg %p166
    // Predicated region
    $region29: #{psp_upsample_forward.2} parent=5 // pred_check
      _
    $region30: #{psp_upsample_forward.2} parent=5 // pred_check_branch
      %169 = sbr.rel (%p166) target = $region32
    $region31: #{psp_upsample_forward.2} parent=5 // pred_region
      %s170 = ssub.s32 %s11, 1
      %p171 = scmp.lt.s32.totalorder %s16, 1
      %s172 = scalar_select %p171, %s16, 1
      %s173 = smul.addr %s172, 10
      %s174 = smul.addr %s173, 4
      %s175 = scalar_lea.vmem %s0, %s174
      %p176 = pneg %p37
      %p177 = pneg %p34
      %p178 = pneg %p58
      %p179 = pneg %p55
      %p180 = pneg %p79
      %p181 = pneg %p76
      %p182 = pneg %p105
      %p183 = pneg %p102
      %p184 = scmp.lt.s32.totalorder %s16, 1
      %s185 = scalar_select %p184, %s16, 1
      %s186 = smul.addr %s185, 9
      %s187 = smul.addr %s186, 4
      %s188 = scalar_lea.vmem %s3, %s187
      %p189 = pneg %p131
      %p190 = pneg %p128
      %p191 = scmp.lt.s32.totalorder %s16, 1
      %s192 = scalar_select %p191, %s16, 1
      %s193 = smul.addr %s192, 8
      %s194 = scalar_lea.vmem %s4, %s193
      %p195 = scmp.lt.s32.totalorder %s16, 1
      %s196 = scalar_select %p195, %s16, 1
      %s197 = smul.addr %s196, 10
      %s198 = smul.addr %s197, 4
      %s199 = scalar_lea.vmem %s0, %s198
      %p200 = scmp.lt.s32.totalorder %s16, 1
      %s201 = scalar_select %p200, %s16, 1
      %s202 = smul.addr %s201, 9
      %s203 = smul.addr %s202, 4
      %s204 = scalar_lea.vmem %s3, %s203
      %p205 = scmp.lt.s32.totalorder %s16, 1
      %s206 = scalar_select %p205, %s16, 1
      %s207 = smul.addr %s206, 8
      %s208 = scalar_lea.vmem %s4, %s207
      %v210 = vld [vmem:[%s199] sm:$0xff]
      %v211 = vld [vmem:[%s199 + $0x8] sm:$0xff]
      %v212 = vld [vmem:[%s199 + $0x10] sm:$0xff]
      %v213 = vld [vmem:[%s199 + $0x18] sm:$0xff]
      %v214 = vld [vmem:[%s199 + $0x20] sm:$0xf]
      %215 = vst [vmem:[#allocation2] sm:$0xff] %v210
      %216 = vst [vmem:[#allocation2 + $0x8] sm:$0xff] %v211
      %217 = vst [vmem:[#allocation2 + $0x10] sm:$0xff] %v212
      %218 = vst [vmem:[#allocation2 + $0x18] sm:$0xff] %v213
      %vm219 = vcmask 519168
      %220 = vst.msk [vmem:[#allocation2 + $0x20] sm:$0xf] %vm219, %v214
      %v221 = vld [vmem:[%s199] sm:$0xff]
      %v222 = vld [vmem:[%s199 + $0x8] sm:$0xff]
      %v223 = vld [vmem:[%s199 + $0x10] sm:$0xff]
      %v224 = vld [vmem:[%s199 + $0x18] sm:$0xff]
      %v225 = vld [vmem:[%s199 + $0x20] sm:$0xf]
      %231 = vrot.lane.b32.xlu0 %v221, 127
      %v232 = vpop.permute.xlu0 %231
      %233 = vrot.lane.b32.xlu0 %v222, 127
      %v234 = vpop.permute.xlu0 %233
      %235 = vrot.lane.b32.xlu0 %v223, 127
      %v236 = vpop.permute.xlu0 %235
      %237 = vrot.lane.b32.xlu0 %v224, 127
      %v238 = vpop.permute.xlu0 %237
      %239 = vrot.lane.b32.xlu0 %v225, 127
      %v240 = vpop.permute.xlu0 %239
      %v241 = vrot.slane %v232, 4
      %v242 = vrot.slane %v234, 4
      %v243 = vrot.slane %v236, 4
      %v244 = vrot.slane %v238, 4
      %v245 = vrot.slane %v240, 4
      %vm246 = vcmask 1043456
      %v247 = vsel %vm246, %v241, %v242
      %vm248 = vcmask 1039360
      %v249 = vsel %vm248, %v232, %v247
      %v250 = vsel %vm246, %v242, %v243
      %v251 = vsel %vm248, %v234, %v250
      %v252 = vsel %vm246, %v243, %v244
      %v253 = vsel %vm248, %v236, %v252
      %v254 = vsel %vm246, %v244, %v245
      %v255 = vsel %vm248, %v238, %v254
      %261 = vst [vmem:[#allocation2 + $0x24] sm:$0xff] %v249
      %262 = vst [vmem:[#allocation2 + $0x2c] sm:$0xff] %v251
      %263 = vst [vmem:[#allocation2 + $0x34] sm:$0xff] %v253
      %264 = vst [vmem:[#allocation2 + $0x3c] sm:$0xff] %v255
      %265 = vst.msk [vmem:[#allocation2 + $0x44] sm:$0xf] %vm219, %v240
      %v266 = vld [vmem:[%s199] sm:$0xff]
      %v267 = vld [vmem:[%s199 + $0x8] sm:$0xff]
      %v268 = vld [vmem:[%s199 + $0x10] sm:$0xff]
      %v269 = vld [vmem:[%s199 + $0x18] sm:$0xff]
      %v270 = vld [vmem:[%s199 + $0x20] sm:$0xf]
      %276 = vrot.lane.b32.xlu0 %v266, 126
      %v277 = vpop.permute.xlu0 %276
      %278 = vrot.lane.b32.xlu0 %v267, 126
      %v279 = vpop.permute.xlu0 %278
      %280 = vrot.lane.b32.xlu0 %v268, 126
      %v281 = vpop.permute.xlu0 %280
      %282 = vrot.lane.b32.xlu0 %v269, 126
      %v283 = vpop.permute.xlu0 %282
      %284 = vrot.lane.b32.xlu0 %v270, 126
      %v285 = vpop.permute.xlu0 %284
      %v286 = vrot.slane %v277, 4
      %v287 = vrot.slane %v279, 4
      %v288 = vrot.slane %v281, 4
      %v289 = vrot.slane %v283, 4
      %v290 = vrot.slane %v285, 4
      %v291 = vsel %vm246, %v286, %v287
      %vm292 = vcmask 1031168
      %v293 = vsel %vm292, %v277, %v291
      %v294 = vsel %vm246, %v287, %v288
      %v295 = vsel %vm292, %v279, %v294
      %v296 = vsel %vm246, %v288, %v289
      %v297 = vsel %vm292, %v281, %v296
      %v298 = vsel %vm246, %v289, %v290
      %v299 = vsel %vm292, %v283, %v298
      %305 = vst [vmem:[#allocation2 + $0x48] sm:$0xff] %v293
      %306 = vst [vmem:[#allocation2 + $0x50] sm:$0xff] %v295
      %307 = vst [vmem:[#allocation2 + $0x58] sm:$0xff] %v297
      %308 = vst [vmem:[#allocation2 + $0x60] sm:$0xff] %v299
      %309 = vst.msk [vmem:[#allocation2 + $0x68] sm:$0xf] %vm219, %v285
      %v310 = vld [vmem:[%s199] sm:$0xff]
      %v311 = vld [vmem:[%s199 + $0x8] sm:$0xff]
      %v312 = vld [vmem:[%s199 + $0x10] sm:$0xff]
      %v313 = vld [vmem:[%s199 + $0x18] sm:$0xff]
      %v314 = vld [vmem:[%s199 + $0x20] sm:$0xf]
      %320 = vrot.lane.b32.xlu0 %v310, 94
      %v321 = vpop.permute.xlu0 %320
      %322 = vrot.lane.b32.xlu0 %v311, 94
      %v323 = vpop.permute.xlu0 %322
      %324 = vrot.lane.b32.xlu0 %v312, 94
      %v325 = vpop.permute.xlu0 %324
      %326 = vrot.lane.b32.xlu0 %v313, 94
      %v327 = vpop.permute.xlu0 %326
      %328 = vrot.lane.b32.xlu0 %v314, 94
      %v329 = vpop.permute.xlu0 %328
      %v330 = vrot.slane %v321, 4
      %v331 = vrot.slane %v323, 4
      %v332 = vrot.slane %v325, 4
      %v333 = vrot.slane %v327, 4
      %v334 = vrot.slane %v329, 4
      %v335 = vsel %vm246, %v330, %v331
      %vm336 = vcmask 769024
      %v337 = vsel %vm336, %v321, %v335
      %v338 = vsel %vm246, %v331, %v332
      %v339 = vsel %vm336, %v323, %v338
      %v340 = vsel %vm246, %v332, %v333
      %v341 = vsel %vm336, %v325, %v340
      %v342 = vsel %vm246, %v333, %v334
      %v343 = vsel %vm336, %v327, %v342
      %349 = vst [vmem:[#allocation2 + $0x6c] sm:$0xff] %v337
      %350 = vst [vmem:[#allocation2 + $0x74] sm:$0xff] %v339
      %351 = vst [vmem:[#allocation2 + $0x7c] sm:$0xff] %v341
      %352 = vst [vmem:[#allocation2 + $0x84] sm:$0xff] %v343
      %353 = vst.msk [vmem:[#allocation2 + $0x8c] sm:$0xf] %vm219, %v329
      %v354 = vld [vmem:[%s199] sm:$0xff]
      %v355 = vld [vmem:[%s199 + $0x8] sm:$0xff]
      %v356 = vld [vmem:[%s199 + $0x10] sm:$0xff]
      %v357 = vld [vmem:[%s199 + $0x18] sm:$0xff]
      %v358 = vld [vmem:[%s199 + $0x20] sm:$0xf]
      %364 = vrot.lane.b32.xlu0 %v354, 93
      %v365 = vpop.permute.xlu0 %364
      %366 = vrot.lane.b32.xlu0 %v355, 93
      %v367 = vpop.permute.xlu0 %366
      %368 = vrot.lane.b32.xlu0 %v356, 93
      %v369 = vpop.permute.xlu0 %368
      %370 = vrot.lane.b32.xlu0 %v357, 93
      %v371 = vpop.permute.xlu0 %370
      %372 = vrot.lane.b32.xlu0 %v358, 93
      %v373 = vpop.permute.xlu0 %372
      %v374 = vrot.slane %v365, 4
      %v375 = vrot.slane %v367, 4
      %v376 = vrot.slane %v369, 4
      %v377 = vrot.slane %v371, 4
      %v378 = vrot.slane %v373, 4
      %v379 = vsel %vm246, %v374, %v375
      %vm380 = vcmask 760832
      %v381 = vsel %vm380, %v365, %v379
      %v382 = vsel %vm246, %v375, %v376
      %v383 = vsel %vm380, %v367, %v382
      %v384 = vsel %vm246, %v376, %v377
      %v385 = vsel %vm380, %v369, %v384
      %v386 = vsel %vm246, %v377, %v378
      %v387 = vsel %vm380, %v371, %v386
      %393 = vst [vmem:[#allocation2 + $0x90] sm:$0xff] %v381
      %394 = vst [vmem:[#allocation2 + $0x98] sm:$0xff] %v383
      %395 = vst [vmem:[#allocation2 + $0xa0] sm:$0xff] %v385
      %396 = vst [vmem:[#allocation2 + $0xa8] sm:$0xff] %v387
      %397 = vst.msk [vmem:[#allocation2 + $0xb0] sm:$0xf] %vm219, %v373
      %v398 = vld [vmem:[%s199] sm:$0xff]
      %v399 = vld [vmem:[%s199 + $0x8] sm:$0xff]
      %v400 = vld [vmem:[%s199 + $0x10] sm:$0xff]
      %v401 = vld [vmem:[%s199 + $0x18] sm:$0xff]
      %v402 = vld [vmem:[%s199 + $0x20] sm:$0xf]
      %408 = vrot.lane.b32.xlu0 %v398, 92
      %v409 = vpop.permute.xlu0 %408
      %410 = vrot.lane.b32.xlu0 %v399, 92
      %v411 = vpop.permute.xlu0 %410
      %412 = vrot.lane.b32.xlu0 %v400, 92
      %v413 = vpop.permute.xlu0 %412
      %414 = vrot.lane.b32.xlu0 %v401, 92
      %v415 = vpop.permute.xlu0 %414
      %416 = vrot.lane.b32.xlu0 %v402, 92
      %v417 = vpop.permute.xlu0 %416
      %v418 = vrot.slane %v409, 4
      %v419 = vrot.slane %v411, 4
      %v420 = vrot.slane %v413, 4
      %v421 = vrot.slane %v415, 4
      %v422 = vrot.slane %v417, 4
      %v423 = vsel %vm246, %v418, %v419
      %vm424 = vcmask 752640
      %v425 = vsel %vm424, %v409, %v423
      %v426 = vsel %vm246, %v419, %v420
      %v427 = vsel %vm424, %v411, %v426
      %v428 = vsel %vm246, %v420, %v421
      %v429 = vsel %vm424, %v413, %v428
      %v430 = vsel %vm246, %v421, %v422
      %v431 = vsel %vm424, %v415, %v430
      %437 = vst [vmem:[#allocation2 + $0xb4] sm:$0xff] %v425
      %438 = vst [vmem:[#allocation2 + $0xbc] sm:$0xff] %v427
      %439 = vst [vmem:[#allocation2 + $0xc4] sm:$0xff] %v429
      %440 = vst [vmem:[#allocation2 + $0xcc] sm:$0xff] %v431
      %441 = vst.msk [vmem:[#allocation2 + $0xd4] sm:$0xf] %vm219, %v417
      %v442 = vld [vmem:[%s199] sm:$0xff]
      %v443 = vld [vmem:[%s199 + $0x8] sm:$0xff]
      %v444 = vld [vmem:[%s199 + $0x10] sm:$0xff]
      %v445 = vld [vmem:[%s199 + $0x18] sm:$0xff]
      %v446 = vld [vmem:[%s199 + $0x20] sm:$0xff]
      %452 = vrot.lane.b32.xlu0 %v442, 60
      %v453 = vpop.permute.xlu0 %452
      %454 = vrot.lane.b32.xlu0 %v443, 60
      %v455 = vpop.permute.xlu0 %454
      %456 = vrot.lane.b32.xlu0 %v444, 60
      %v457 = vpop.permute.xlu0 %456
      %458 = vrot.lane.b32.xlu0 %v445, 60
      %v459 = vpop.permute.xlu0 %458
      %460 = vrot.lane.b32.xlu0 %v446, 60
      %v461 = vpop.permute.xlu0 %460
      %v462 = vrot.slane %v453, 4
      %v463 = vrot.slane %v455, 4
      %v464 = vrot.slane %v457, 4
      %v465 = vrot.slane %v459, 4
      %v466 = vrot.slane %v461, 4
      %v467 = vsel %vm246, %v462, %v463
      %vm468 = vcmask 490496
      %v469 = vsel %vm468, %v453, %v467
      %v470 = vsel %vm246, %v463, %v464
      %v471 = vsel %vm468, %v455, %v470
      %v472 = vsel %vm246, %v464, %v465
      %v473 = vsel %vm468, %v457, %v472
      %v474 = vsel %vm246, %v465, %v466
      %v475 = vsel %vm468, %v459, %v474
      %v476 = vsel %vm468, %v461, %v466
      %482 = vst [vmem:[#allocation2 + $0xd8] sm:$0xff] %v469
      %483 = vst [vmem:[#allocation2 + $0xe0] sm:$0xff] %v471
      %484 = vst [vmem:[#allocation2 + $0xe8] sm:$0xff] %v473
      %485 = vst [vmem:[#allocation2 + $0xf0] sm:$0xff] %v475
      %486 = vst.msk [vmem:[#allocation2 + $0xf8] sm:$0xf] %vm219, %v476
      %v487 = vld [vmem:[%s199] sm:$0xff]
      %v488 = vld [vmem:[%s199 + $0x8] sm:$0xff]
      %v489 = vld [vmem:[%s199 + $0x10] sm:$0xff]
      %v490 = vld [vmem:[%s199 + $0x18] sm:$0xff]
      %v491 = vld [vmem:[%s199 + $0x20] sm:$0xff]
      %497 = vrot.lane.b32.xlu0 %v487, 59
      %v498 = vpop.permute.xlu0 %497
      %499 = vrot.lane.b32.xlu0 %v488, 59
      %v500 = vpop.permute.xlu0 %499
      %501 = vrot.lane.b32.xlu0 %v489, 59
      %v502 = vpop.permute.xlu0 %501
      %503 = vrot.lane.b32.xlu0 %v490, 59
      %v504 = vpop.permute.xlu0 %503
      %505 = vrot.lane.b32.xlu0 %v491, 59
      %v506 = vpop.permute.xlu0 %505
      %v507 = vrot.slane %v498, 4
      %v508 = vrot.slane %v500, 4
      %v509 = vrot.slane %v502, 4
      %v510 = vrot.slane %v504, 4
      %v511 = vrot.slane %v506, 4
      %v512 = vsel %vm246, %v507, %v508
      %vm513 = vcmask 482304
      %v514 = vsel %vm513, %v498, %v512
      %v515 = vsel %vm246, %v508, %v509
      %v516 = vsel %vm513, %v500, %v515
      %v517 = vsel %vm246, %v509, %v510
      %v518 = vsel %vm513, %v502, %v517
      %v519 = vsel %vm246, %v510, %v511
      %v520 = vsel %vm513, %v504, %v519
      %v521 = vsel %vm513, %v506, %v511
      %527 = vst [vmem:[#allocation2 + $0xfc] sm:$0xff] %v514
      %528 = vst [vmem:[#allocation2 + $0x104] sm:$0xff] %v516
      %529 = vst [vmem:[#allocation2 + $0x10c] sm:$0xff] %v518
      %530 = vst [vmem:[#allocation2 + $0x114] sm:$0xff] %v520
      %531 = vst.msk [vmem:[#allocation2 + $0x11c] sm:$0xf] %vm219, %v521
      %v532 = vld [vmem:[%s199] sm:$0xff]
      %v533 = vld [vmem:[%s199 + $0x8] sm:$0xff]
      %v534 = vld [vmem:[%s199 + $0x10] sm:$0xff]
      %v535 = vld [vmem:[%s199 + $0x18] sm:$0xff]
      %v536 = vld [vmem:[%s199 + $0x20] sm:$0xff]
      %542 = vrot.lane.b32.xlu0 %v532, 58
      %v543 = vpop.permute.xlu0 %542
      %544 = vrot.lane.b32.xlu0 %v533, 58
      %v545 = vpop.permute.xlu0 %544
      %546 = vrot.lane.b32.xlu0 %v534, 58
      %v547 = vpop.permute.xlu0 %546
      %548 = vrot.lane.b32.xlu0 %v535, 58
      %v549 = vpop.permute.xlu0 %548
      %550 = vrot.lane.b32.xlu0 %v536, 58
      %v551 = vpop.permute.xlu0 %550
      %v552 = vrot.slane %v543, 4
      %v553 = vrot.slane %v545, 4
      %v554 = vrot.slane %v547, 4
      %v555 = vrot.slane %v549, 4
      %v556 = vrot.slane %v551, 4
      %v557 = vsel %vm246, %v552, %v553
      %vm558 = vcmask 474112
      %v559 = vsel %vm558, %v543, %v557
      %v560 = vsel %vm246, %v553, %v554
      %v561 = vsel %vm558, %v545, %v560
      %v562 = vsel %vm246, %v554, %v555
      %v563 = vsel %vm558, %v547, %v562
      %v564 = vsel %vm246, %v555, %v556
      %v565 = vsel %vm558, %v549, %v564
      %v566 = vsel %vm558, %v551, %v556
      %572 = vst [vmem:[#allocation2 + $0x120] sm:$0xff] %v559
      %573 = vst [vmem:[#allocation2 + $0x128] sm:$0xff] %v561
      %574 = vst [vmem:[#allocation2 + $0x130] sm:$0xff] %v563
      %575 = vst [vmem:[#allocation2 + $0x138] sm:$0xff] %v565
      %576 = vst.msk [vmem:[#allocation2 + $0x140] sm:$0xf] %vm219, %v566
      %v577 = vld [vmem:[%s1] sm:$0xf]
      %v578 = vld [vmem:[#allocation2] sm:$0xff]
      %v579 = vld [vmem:[#allocation2 + $0x8] sm:$0xff]
      %v580 = vld [vmem:[#allocation2 + $0x10] sm:$0xff]
      %v581 = vld [vmem:[#allocation2 + $0x18] sm:$0xff]
      %v582 = vld [vmem:[#allocation2 + $0x20] sm:$0xf]
      %v583 = vld [vmem:[#allocation2 + $0x24] sm:$0xff]
      %v584 = vld [vmem:[#allocation2 + $0x2c] sm:$0xff]
      %v585 = vld [vmem:[#allocation2 + $0x34] sm:$0xff]
      %v586 = vld [vmem:[#allocation2 + $0x3c] sm:$0xff]
      %v587 = vld [vmem:[#allocation2 + $0x44] sm:$0xf]
      %v588 = vld [vmem:[#allocation2 + $0x48] sm:$0xff]
      %v589 = vld [vmem:[#allocation2 + $0x50] sm:$0xff]
      %v590 = vld [vmem:[#allocation2 + $0x58] sm:$0xff]
      %v591 = vld [vmem:[#allocation2 + $0x60] sm:$0xff]
      %v592 = vld [vmem:[#allocation2 + $0x68] sm:$0xf]
      %v593 = vld [vmem:[#allocation2 + $0x6c] sm:$0xff]
      %v594 = vld [vmem:[#allocation2 + $0x74] sm:$0xff]
      %v595 = vld [vmem:[#allocation2 + $0x7c] sm:$0xff]
      %v596 = vld [vmem:[#allocation2 + $0x84] sm:$0xff]
      %v597 = vld [vmem:[#allocation2 + $0x8c] sm:$0xf]
      %v598 = vld [vmem:[#allocation2 + $0x90] sm:$0xff]
      %v599 = vld [vmem:[#allocation2 + $0x98] sm:$0xff]
      %v600 = vld [vmem:[#allocation2 + $0xa0] sm:$0xff]
      %v601 = vld [vmem:[#allocation2 + $0xa8] sm:$0xff]
      %v602 = vld [vmem:[#allocation2 + $0xb0] sm:$0xf]
      %v603 = vld [vmem:[#allocation2 + $0xb4] sm:$0xff]
      %v604 = vld [vmem:[#allocation2 + $0xbc] sm:$0xff]
      %v605 = vld [vmem:[#allocation2 + $0xc4] sm:$0xff]
      %v606 = vld [vmem:[#allocation2 + $0xcc] sm:$0xff]
      %v607 = vld [vmem:[#allocation2 + $0xd4] sm:$0xf]
      %v608 = vld [vmem:[#allocation2 + $0xd8] sm:$0xff]
      %v609 = vld [vmem:[#allocation2 + $0xe0] sm:$0xff]
      %v610 = vld [vmem:[#allocation2 + $0xe8] sm:$0xff]
      %v611 = vld [vmem:[#allocation2 + $0xf0] sm:$0xff]
      %v612 = vld [vmem:[#allocation2 + $0xf8] sm:$0xf]
      %v613 = vld [vmem:[#allocation2 + $0xfc] sm:$0xff]
      %v614 = vld [vmem:[#allocation2 + $0x104] sm:$0xff]
      %v615 = vld [vmem:[#allocation2 + $0x10c] sm:$0xff]
      %v616 = vld [vmem:[#allocation2 + $0x114] sm:$0xff]
      %v617 = vld [vmem:[#allocation2 + $0x11c] sm:$0xf]
      %v618 = vld [vmem:[#allocation2 + $0x120] sm:$0xff]
      %v619 = vld [vmem:[#allocation2 + $0x128] sm:$0xff]
      %v620 = vld [vmem:[#allocation2 + $0x130] sm:$0xff]
      %v621 = vld [vmem:[#allocation2 + $0x138] sm:$0xff]
      %v622 = vld [vmem:[#allocation2 + $0x140] sm:$0xf]
      %v668 = vunpack.c.l.b16 %v578
      %v669 = vunpack.c.h.b16 %v578
      %v670 = vunpack.c.l.b16 %v579
      %v671 = vunpack.c.h.b16 %v579
      %v672 = vunpack.c.l.b16 %v580
      %v673 = vunpack.c.h.b16 %v580
      %v674 = vunpack.c.l.b16 %v581
      %v675 = vunpack.c.h.b16 %v581
      %v676 = vunpack.c.l.b16 %v582
      %v677 = vunpack.c.l.b16 %v583
      %v678 = vunpack.c.h.b16 %v583
      %v679 = vunpack.c.l.b16 %v584
      %v680 = vunpack.c.h.b16 %v584
      %v681 = vunpack.c.l.b16 %v585
      %v682 = vunpack.c.h.b16 %v585
      %v683 = vunpack.c.l.b16 %v586
      %v684 = vunpack.c.h.b16 %v586
      %v685 = vunpack.c.l.b16 %v587
      %v686 = vunpack.c.l.b16 %v588
      %v687 = vunpack.c.h.b16 %v588
      %v688 = vunpack.c.l.b16 %v589
      %v689 = vunpack.c.h.b16 %v589
      %v690 = vunpack.c.l.b16 %v590
      %v691 = vunpack.c.h.b16 %v590
      %v692 = vunpack.c.l.b16 %v591
      %v693 = vunpack.c.h.b16 %v591
      %v694 = vunpack.c.l.b16 %v592
      %v695 = vunpack.c.l.b16 %v593
      %v696 = vunpack.c.h.b16 %v593
      %v697 = vunpack.c.l.b16 %v594
      %v698 = vunpack.c.h.b16 %v594
      %v699 = vunpack.c.l.b16 %v595
      %v700 = vunpack.c.h.b16 %v595
      %v701 = vunpack.c.l.b16 %v596
      %v702 = vunpack.c.h.b16 %v596
      %v703 = vunpack.c.l.b16 %v597
      %v704 = vunpack.c.l.b16 %v598
      %v705 = vunpack.c.h.b16 %v598
      %v706 = vunpack.c.l.b16 %v599
      %v707 = vunpack.c.h.b16 %v599
      %v708 = vunpack.c.l.b16 %v600
      %v709 = vunpack.c.h.b16 %v600
      %v710 = vunpack.c.l.b16 %v601
      %v711 = vunpack.c.h.b16 %v601
      %v712 = vunpack.c.l.b16 %v602
      %v713 = vunpack.c.l.b16 %v603
      %v714 = vunpack.c.h.b16 %v603
      %v715 = vunpack.c.l.b16 %v604
      %v716 = vunpack.c.h.b16 %v604
      %v717 = vunpack.c.l.b16 %v605
      %v718 = vunpack.c.h.b16 %v605
      %v719 = vunpack.c.l.b16 %v606
      %v720 = vunpack.c.h.b16 %v606
      %v721 = vunpack.c.l.b16 %v607
      %v722 = vunpack.c.l.b16 %v608
      %v723 = vunpack.c.h.b16 %v608
      %v724 = vunpack.c.l.b16 %v609
      %v725 = vunpack.c.h.b16 %v609
      %v726 = vunpack.c.l.b16 %v610
      %v727 = vunpack.c.h.b16 %v610
      %v728 = vunpack.c.l.b16 %v611
      %v729 = vunpack.c.h.b16 %v611
      %v730 = vunpack.c.l.b16 %v612
      %v731 = vunpack.c.l.b16 %v613
      %v732 = vunpack.c.h.b16 %v613
      %v733 = vunpack.c.l.b16 %v614
      %v734 = vunpack.c.h.b16 %v614
      %v735 = vunpack.c.l.b16 %v615
      %v736 = vunpack.c.h.b16 %v615
      %v737 = vunpack.c.l.b16 %v616
      %v738 = vunpack.c.h.b16 %v616
      %v739 = vunpack.c.l.b16 %v617
      %v740 = vunpack.c.l.b16 %v618
      %v741 = vunpack.c.h.b16 %v618
      %v742 = vunpack.c.l.b16 %v619
      %v743 = vunpack.c.h.b16 %v619
      %v744 = vunpack.c.l.b16 %v620
      %v745 = vunpack.c.h.b16 %v620
      %v746 = vunpack.c.l.b16 %v621
      %v747 = vunpack.c.h.b16 %v621
      %v748 = vunpack.c.l.b16 %v622
      %v749 = vpack.c.b16 %v677, %v668
      %v750 = vpack.c.b16 %v678, %v669
      %v751 = vpack.c.b16 %v679, %v670
      %v752 = vpack.c.b16 %v680, %v671
      %v753 = vpack.c.b16 %v681, %v672
      %v754 = vpack.c.b16 %v682, %v673
      %v755 = vpack.c.b16 %v683, %v674
      %v756 = vpack.c.b16 %v684, %v675
      %v757 = vpack.c.b16 %v685, %v676
      %v758 = vpack.c.b16 %v695, %v686
      %v759 = vpack.c.b16 %v696, %v687
      %v760 = vpack.c.b16 %v697, %v688
      %v761 = vpack.c.b16 %v698, %v689
      %v762 = vpack.c.b16 %v699, %v690
      %v763 = vpack.c.b16 %v700, %v691
      %v764 = vpack.c.b16 %v701, %v692
      %v765 = vpack.c.b16 %v702, %v693
      %v766 = vpack.c.b16 %v703, %v694
      %v767 = vpack.c.b16 %v713, %v704
      %v768 = vpack.c.b16 %v714, %v705
      %v769 = vpack.c.b16 %v715, %v706
      %v770 = vpack.c.b16 %v716, %v707
      %v771 = vpack.c.b16 %v717, %v708
      %v772 = vpack.c.b16 %v718, %v709
      %v773 = vpack.c.b16 %v719, %v710
      %v774 = vpack.c.b16 %v720, %v711
      %v775 = vpack.c.b16 %v721, %v712
      %v776 = vpack.c.b16 %v731, %v722
      %v777 = vpack.c.b16 %v732, %v723
      %v778 = vpack.c.b16 %v733, %v724
      %v779 = vpack.c.b16 %v734, %v725
      %v780 = vpack.c.b16 %v735, %v726
      %v781 = vpack.c.b16 %v736, %v727
      %v782 = vpack.c.b16 %v737, %v728
      %v783 = vpack.c.b16 %v738, %v729
      %v784 = vpack.c.b16 %v739, %v730
      %v785 = vpack.c.b16 %v740, %v740
      %v786 = vpack.c.b16 %v741, %v741
      %v787 = vpack.c.b16 %v742, %v742
      %v788 = vpack.c.b16 %v743, %v743
      %v789 = vpack.c.b16 %v744, %v744
      %v790 = vpack.c.b16 %v745, %v745
      %v791 = vpack.c.b16 %v746, %v746
      %v792 = vpack.c.b16 %v747, %v747
      %v793 = vpack.c.b16 %v748, %v748
      %vm830 = vcmask 588800
      %v832 = vsel %vm830, %v577, 0
      %vm834 = vcmask 1043456
      %v836 = vsel %vm834, %v785, 0
      %v839 = vsel %vm834, %v786, 0
      %v842 = vsel %vm834, %v787, 0
      %v845 = vsel %vm834, %v788, 0
      %v848 = vsel %vm834, %v789, 0
      %v851 = vsel %vm834, %v790, 0
      %v854 = vsel %vm834, %v791, 0
      %v857 = vsel %vm834, %v792, 0
      %v860 = vsel %vm834, %v793, 0
      %862 = vmatprep.subr.bf16.mxu0 %v750
      %863 = vmatpush1.bf16.msra.mxu0 %v749
      %864 = vmatprep.subr.bf16.mxu0 %v759
      %865 = vmatpush1.bf16.msra.mxu0 %v758
      %866 = vmatprep.subr.bf16.mxu0 %v768
      %867 = vmatpush1.bf16.msra.mxu0 %v767
      %868 = vmatprep.subr.bf16.mxu0 %v777
      %869 = vmatpush1.bf16.msra.mxu0 %v776
      %870 = vmatprep.subr.bf16.mxu0 %v839
      %871 = vmatpush1.bf16.msra.mxu0 %v836
      %872 = vmatprep.subr.bf16.mxu0 0
      %873 = vmatpush1.bf16.msra.mxu0 0
      %874 = vmatprep.subr.bf16.mxu0 0
      %875 = vmatpush1.bf16.msra.mxu0 0
      %876 = vmatprep.subr.bf16.mxu0 0
      %877 = vmatpush1.bf16.msra.mxu0 0
      %878 = vmatprep.subr.bf16.mxu0 0
      %879 = vmatpush1.bf16.msra.mxu0 0
      %880 = vmatprep.subr.bf16.mxu0 0
      %881 = vmatpush1.bf16.msra.mxu0 0
      %882 = vmatprep.subr.bf16.mxu0 0
      %883 = vmatpush1.bf16.msra.mxu0 0
      %884 = vmatprep.subr.bf16.mxu0 0
      %885 = vmatpush1.bf16.msra.mxu0 0
      %886 = vmatprep.subr.bf16.mxu0 0
      %887 = vmatpush1.bf16.msra.mxu0 0
      %888 = vmatprep.subr.bf16.mxu0 0
      %889 = vmatpush1.bf16.msra.mxu0 0
      %890 = vmatprep.subr.bf16.mxu0 0
      %891 = vmatpush1.bf16.msra.mxu0 0
      %892 = vmatprep.subr.bf16.mxu0 0
      %893 = vmatpush1.bf16.msra.mxu0 0
      %894 = vmatprep.mubr.bf16.mxu0 0
      %895 = vmatmul.mubr.bf16.gmra.mrb[0].mxu0 %v832
      %v896 = vpop.f32.mrb[0].mxu0
      %v897 = vadd.f32 0.0, %v896
      %v898 = vpop.f32.mrb[0].mxu0
      %v899 = vadd.f32 0.0, %v898
      %v900 = vpop.f32.mrb[0].mxu0
      %v901 = vpop.f32.mrb[0].mxu0
      %902 = vdwg.mxu0
      %903 = vmatprep.subr.bf16.mxu0 %v752
      %904 = vmatpush1.bf16.msra.mxu0 %v751
      %905 = vmatprep.subr.bf16.mxu0 %v761
      %906 = vmatpush1.bf16.msra.mxu0 %v760
      %907 = vmatprep.subr.bf16.mxu0 %v770
      %908 = vmatpush1.bf16.msra.mxu0 %v769
      %909 = vmatprep.subr.bf16.mxu0 %v779
      %910 = vmatpush1.bf16.msra.mxu0 %v778
      %911 = vmatprep.subr.bf16.mxu0 %v845
      %912 = vmatpush1.bf16.msra.mxu0 %v842
      %913 = vmatprep.subr.bf16.mxu0 0
      %914 = vmatpush1.bf16.msra.mxu0 0
      %915 = vmatprep.subr.bf16.mxu0 0
      %916 = vmatpush1.bf16.msra.mxu0 0
      %917 = vmatprep.subr.bf16.mxu0 0
      %918 = vmatpush1.bf16.msra.mxu0 0
      %919 = vmatprep.subr.bf16.mxu0 0
      %920 = vmatpush1.bf16.msra.mxu0 0
      %921 = vmatprep.subr.bf16.mxu0 0
      %922 = vmatpush1.bf16.msra.mxu0 0
      %923 = vmatprep.subr.bf16.mxu0 0
      %924 = vmatpush1.bf16.msra.mxu0 0
      %925 = vmatprep.subr.bf16.mxu0 0
      %926 = vmatpush1.bf16.msra.mxu0 0
      %927 = vmatprep.subr.bf16.mxu0 0
      %928 = vmatpush1.bf16.msra.mxu0 0
      %929 = vmatprep.subr.bf16.mxu0 0
      %930 = vmatpush1.bf16.msra.mxu0 0
      %931 = vmatprep.subr.bf16.mxu0 0
      %932 = vmatpush1.bf16.msra.mxu0 0
      %933 = vmatprep.subr.bf16.mxu0 0
      %934 = vmatpush1.bf16.msra.mxu0 0
      %935 = vmatprep.mubr.bf16.mxu0 0
      %936 = vmatmul.mubr.bf16.gmra.mrb[0].mxu0 %v832
      %v937 = vpop.f32.mrb[0].mxu0
      %v938 = vadd.f32 0.0, %v937
      %v939 = vpop.f32.mrb[0].mxu0
      %v940 = vadd.f32 0.0, %v939
      %v941 = vpop.f32.mrb[0].mxu0
      %v942 = vpop.f32.mrb[0].mxu0
      %943 = vdwg.mxu0
      %944 = vmatprep.subr.bf16.mxu0 %v754
      %945 = vmatpush1.bf16.msra.mxu0 %v753
      %946 = vmatprep.subr.bf16.mxu0 %v763
      %947 = vmatpush1.bf16.msra.mxu0 %v762
      %948 = vmatprep.subr.bf16.mxu0 %v772
      %949 = vmatpush1.bf16.msra.mxu0 %v771
      %950 = vmatprep.subr.bf16.mxu0 %v781
      %951 = vmatpush1.bf16.msra.mxu0 %v780
      %952 = vmatprep.subr.bf16.mxu0 %v851
      %953 = vmatpush1.bf16.msra.mxu0 %v848
      %954 = vmatprep.subr.bf16.mxu0 0
      %955 = vmatpush1.bf16.msra.mxu0 0
      %956 = vmatprep.subr.bf16.mxu0 0
      %957 = vmatpush1.bf16.msra.mxu0 0
      %958 = vmatprep.subr.bf16.mxu0 0
      %959 = vmatpush1.bf16.msra.mxu0 0
      %960 = vmatprep.subr.bf16.mxu0 0
      %961 = vmatpush1.bf16.msra.mxu0 0
      %962 = vmatprep.subr.bf16.mxu0 0
      %963 = vmatpush1.bf16.msra.mxu0 0
      %964 = vmatprep.subr.bf16.mxu0 0
      %965 = vmatpush1.bf16.msra.mxu0 0
      %966 = vmatprep.subr.bf16.mxu0 0
      %967 = vmatpush1.bf16.msra.mxu0 0
      %968 = vmatprep.subr.bf16.mxu0 0
      %969 = vmatpush1.bf16.msra.mxu0 0
      %970 = vmatprep.subr.bf16.mxu0 0
      %971 = vmatpush1.bf16.msra.mxu0 0
      %972 = vmatprep.subr.bf16.mxu0 0
      %973 = vmatpush1.bf16.msra.mxu0 0
      %974 = vmatprep.subr.bf16.mxu0 0
      %975 = vmatpush1.bf16.msra.mxu0 0
      %976 = vmatprep.mubr.bf16.mxu0 0
      %977 = vmatmul.mubr.bf16.gmra.mrb[0].mxu0 %v832
      %v978 = vpop.f32.mrb[0].mxu0
      %v979 = vadd.f32 0.0, %v978
      %v980 = vpop.f32.mrb[0].mxu0
      %v981 = vadd.f32 0.0, %v980
      %v982 = vpop.f32.mrb[0].mxu0
      %v983 = vpop.f32.mrb[0].mxu0
      %984 = vdwg.mxu0
      %985 = vmatprep.subr.bf16.mxu0 %v756
      %986 = vmatpush1.bf16.msra.mxu0 %v755
      %987 = vmatprep.subr.bf16.mxu0 %v765
      %988 = vmatpush1.bf16.msra.mxu0 %v764
      %989 = vmatprep.subr.bf16.mxu0 %v774
      %990 = vmatpush1.bf16.msra.mxu0 %v773
      %991 = vmatprep.subr.bf16.mxu0 %v783
      %992 = vmatpush1.bf16.msra.mxu0 %v782
      %993 = vmatprep.subr.bf16.mxu0 %v857
      %994 = vmatpush1.bf16.msra.mxu0 %v854
      %995 = vmatprep.subr.bf16.mxu0 0
      %996 = vmatpush1.bf16.msra.mxu0 0
      %997 = vmatprep.subr.bf16.mxu0 0
      %998 = vmatpush1.bf16.msra.mxu0 0
      %999 = vmatprep.subr.bf16.mxu0 0
      %1000 = vmatpush1.bf16.msra.mxu0 0
      %1001 = vmatprep.subr.bf16.mxu0 0
      %1002 = vmatpush1.bf16.msra.mxu0 0
      %1003 = vmatprep.subr.bf16.mxu0 0
      %1004 = vmatpush1.bf16.msra.mxu0 0
      %1005 = vmatprep.subr.bf16.mxu0 0
      %1006 = vmatpush1.bf16.msra.mxu0 0
      %1007 = vmatprep.subr.bf16.mxu0 0
      %1008 = vmatpush1.bf16.msra.mxu0 0
      %1009 = vmatprep.subr.bf16.mxu0 0
      %1010 = vmatpush1.bf16.msra.mxu0 0
      %1011 = vmatprep.subr.bf16.mxu0 0
      %1012 = vmatpush1.bf16.msra.mxu0 0
      %1013 = vmatprep.subr.bf16.mxu0 0
      %1014 = vmatpush1.bf16.msra.mxu0 0
      %1015 = vmatprep.subr.bf16.mxu0 0
      %1016 = vmatpush1.bf16.msra.mxu0 0
      %1017 = vmatprep.mubr.bf16.mxu0 0
      %1018 = vmatmul.mubr.bf16.gmra.mrb[0].mxu0 %v832
      %v1019 = vpop.f32.mrb[0].mxu0
      %v1020 = vadd.f32 0.0, %v1019
      %v1021 = vpop.f32.mrb[0].mxu0
      %v1022 = vadd.f32 0.0, %v1021
      %v1023 = vpop.f32.mrb[0].mxu0
      %v1024 = vpop.f32.mrb[0].mxu0
      %1025 = vdwg.mxu0
      %1026 = vmatprep.subr.bf16.mxu0 0
      %1027 = vmatpush1.bf16.msra.mxu0 %v757
      %1028 = vmatprep.subr.bf16.mxu0 0
      %1029 = vmatpush1.bf16.msra.mxu0 %v766
      %1030 = vmatprep.subr.bf16.mxu0 0
      %1031 = vmatpush1.bf16.msra.mxu0 %v775
      %1032 = vmatprep.subr.bf16.mxu0 0
      %1033 = vmatpush1.bf16.msra.mxu0 %v784
      %1034 = vmatprep.subr.bf16.mxu0 0
      %1035 = vmatpush1.bf16.msra.mxu0 %v860
      %1036 = vmatprep.subr.bf16.mxu0 0
      %1037 = vmatpush1.bf16.msra.mxu0 0
      %1038 = vmatprep.subr.bf16.mxu0 0
      %1039 = vmatpush1.bf16.msra.mxu0 0
      %1040 = vmatprep.subr.bf16.mxu0 0
      %1041 = vmatpush1.bf16.msra.mxu0 0
      %1042 = vmatprep.subr.bf16.mxu0 0
      %1043 = vmatpush1.bf16.msra.mxu0 0
      %1044 = vmatprep.subr.bf16.mxu0 0
      %1045 = vmatpush1.bf16.msra.mxu0 0
      %1046 = vmatprep.subr.bf16.mxu0 0
      %1047 = vmatpush1.bf16.msra.mxu0 0
      %1048 = vmatprep.subr.bf16.mxu0 0
      %1049 = vmatpush1.bf16.msra.mxu0 0
      %1050 = vmatprep.subr.bf16.mxu0 0
      %1051 = vmatpush1.bf16.msra.mxu0 0
      %1052 = vmatprep.subr.bf16.mxu0 0
      %1053 = vmatpush1.bf16.msra.mxu0 0
      %1054 = vmatprep.subr.bf16.mxu0 0
      %1055 = vmatpush1.bf16.msra.mxu0 0
      %1056 = vmatprep.subr.bf16.mxu0 0
      %1057 = vmatpush1.bf16.msra.mxu0 0
      %1058 = vmatprep.mubr.bf16.mxu0 0
      %1059 = vmatmul.mubr.bf16.gmra.mrb[0].mxu0 %v832
      %v1060 = vpop.f32.mrb[0].mxu0
      %v1061 = vadd.f32 0.0, %v1060
      %v1062 = vpop.f32.mrb[0].mxu0
      %v1063 = vpop.f32.mrb[0].mxu0
      %v1064 = vpop.f32.mrb[0].mxu0
      %1065 = vdwg.mxu0
      %v1066 = vpack.c.bf16 %v897, %v897
      %v1067 = vpack.c.bf16 %v899, %v899
      %v1068 = vpack.c.bf16 %v938, %v938
      %v1069 = vpack.c.bf16 %v940, %v940
      %v1070 = vpack.c.bf16 %v979, %v979
      %v1071 = vpack.c.bf16 %v981, %v981
      %v1072 = vpack.c.bf16 %v1020, %v1020
      %v1073 = vpack.c.bf16 %v1022, %v1022
      %v1074 = vpack.c.bf16 %v1061, %v1061
      %v1084 = vunpack.c.l.b16 %v1066
      %v1085 = vunpack.c.l.b16 %v1067
      %v1086 = vunpack.c.l.b16 %v1068
      %v1087 = vunpack.c.l.b16 %v1069
      %v1088 = vunpack.c.l.b16 %v1070
      %v1089 = vunpack.c.l.b16 %v1071
      %v1090 = vunpack.c.l.b16 %v1072
      %v1091 = vunpack.c.l.b16 %v1073
      %v1092 = vunpack.c.l.b16 %v1074
      %v1093 = vpack.c.b16 %v1085, %v1084
      %v1094 = vpack.c.b16 %v1087, %v1086
      %v1095 = vpack.c.b16 %v1089, %v1088
      %v1096 = vpack.c.b16 %v1091, %v1090
      %v1097 = vpack.c.b16 %v1092, %v1092
      %1103 = vst [vmem:[%s204] sm:$0xff] %v1093
      %1104 = vst [vmem:[%s204 + $0x8] sm:$0xff] %v1094
      %1105 = vst [vmem:[%s204 + $0x10] sm:$0xff] %v1095
      %1106 = vst [vmem:[%s204 + $0x18] sm:$0xff] %v1096
      %1107 = vst.msk [vmem:[%s204 + $0x20] sm:$0xf] %vm219, %v1097
      %v1108 = vld [vmem:[%s2] sm:$0xff]
      %v1109 = vld [vmem:[%s2 + $0x8] sm:$0x1]
      %v1112 = vlaneseq
      %v1113 = vshrl.u32 %v1112, 7
      %v1114 = vsub.s32 0, %v1113
      %v1115 = vrot.slane %v1108, %v1114
      %v1116 = vlaneseq
      %v1117 = vshrl.u32 %v1116, 7
      %v1118 = vsub.s32 1, %v1117
      %v1119 = vrot.slane %v1108, %v1118
      %v1120 = vlaneseq
      %v1121 = vshrl.u32 %v1120, 7
      %v1122 = vsub.s32 2, %v1121
      %v1123 = vrot.slane %v1108, %v1122
      %v1124 = vlaneseq
      %v1125 = vshrl.u32 %v1124, 7
      %v1126 = vsub.s32 3, %v1125
      %v1127 = vrot.slane %v1108, %v1126
      %v1128 = vlaneseq
      %v1129 = vshrl.u32 %v1128, 7
      %v1130 = vsub.s32 4, %v1129
      %v1131 = vrot.slane %v1108, %v1130
      %v1132 = vlaneseq
      %v1133 = vshrl.u32 %v1132, 7
      %v1134 = vsub.s32 5, %v1133
      %v1135 = vrot.slane %v1108, %v1134
      %v1136 = vlaneseq
      %v1137 = vshrl.u32 %v1136, 7
      %v1138 = vsub.s32 6, %v1137
      %v1139 = vrot.slane %v1108, %v1138
      %v1140 = vlaneseq
      %v1141 = vshrl.u32 %v1140, 7
      %v1142 = vsub.s32 7, %v1141
      %v1143 = vrot.slane %v1108, %v1142
      %v1144 = vlaneseq
      %v1145 = vshrl.u32 %v1144, 7
      %v1146 = vsub.s32 0, %v1145
      %v1147 = vrot.slane %v1109, %v1146
      %v1157 = vmul.f32 %v897, %v1115
      %v1158 = vmul.f32 %v899, %v1119
      %v1159 = vmul.f32 %v938, %v1123
      %v1160 = vmul.f32 %v940, %v1127
      %v1161 = vmul.f32 %v979, %v1131
      %v1162 = vmul.f32 %v981, %v1135
      %v1163 = vmul.f32 %v1020, %v1139
      %v1164 = vmul.f32 %v1022, %v1143
      %v1165 = vmul.f32 %v1061, %v1147
      %v1166 = vadd.f32 %v1157, %v1158
      %v1167 = vadd.f32 %v1166, %v1159
      %v1168 = vadd.f32 %v1167, %v1160
      %v1169 = vadd.f32 %v1168, %v1161
      %v1170 = vadd.f32 %v1169, %v1162
      %v1171 = vadd.f32 %v1170, %v1163
      %v1172 = vadd.f32 %v1171, %v1164
      %vm1173 = vcmask 523264
      %v1174 = vsel %vm1173, %v1165, 0.0
      %v1175 = vadd.f32 %v1172, %v1174
      %1176 = vadd.xlane.f32.xlu0 %v1175
      %v1177 = vpop.xlane.xlu0 %1176
      %vm1178 = vcmask 7168
      %1179 = vst.msk [vmem:[%s208] sm:$0xff] %vm1178, %v1177
      %v1180 = vmul.f32 %v1157, %v897
      %v1181 = vmul.f32 %v1158, %v899
      %v1182 = vmul.f32 %v1159, %v938
      %v1183 = vmul.f32 %v1160, %v940
      %v1184 = vmul.f32 %v1161, %v979
      %v1185 = vmul.f32 %v1162, %v981
      %v1186 = vmul.f32 %v1163, %v1020
      %v1187 = vmul.f32 %v1164, %v1022
      %v1188 = vmul.f32 %v1165, %v1061
      %v1189 = vadd.f32 %v1180, %v1181
      %v1190 = vadd.f32 %v1189, %v1182
      %v1191 = vadd.f32 %v1190, %v1183
      %v1192 = vadd.f32 %v1191, %v1184
      %v1193 = vadd.f32 %v1192, %v1185
      %v1194 = vadd.f32 %v1193, %v1186
      %v1195 = vadd.f32 %v1194, %v1187
      %v1196 = vsel %vm1173, %v1188, 0.0
      %v1197 = vadd.f32 %v1195, %v1196
      %1198 = vadd.xlane.f32.xlu0 %v1197
      %v1199 = vpop.xlane.xlu0 %1198
      %vm1200 = vcmask 15368
      %1201 = vst.msk [vmem:[%s208] sm:$0xff] %vm1200, %v1199
      %p1202 = scmp.lt.s32.totalorder %s16, 1
      %s1203 = scalar_select %p1202, %s16, 1
      %s1204 = smul.addr %s1203, 9
      %s1205 = smul.addr %s1204, 4
      %s1206 = scalar_lea.vmem %s3, %s1205
      %p1207 = scmp.lt.s32.totalorder %s16, 1
      %s1208 = scalar_select %p1207, %s16, 1
      %s1209 = smul.addr %s1208, 8
      %s1210 = scalar_lea.vmem %s4, %s1209
      // Predicated region
      $region33: #{psp_upsample_forward.2} parent=31 // pred_check
        %p1211 = pneg %p102
      $region34: #{psp_upsample_forward.2} parent=31 // pred_check_branch
        %1213 = sbr.rel (%p1211) target = $region36
      $region35: #{psp_upsample_forward.2} parent=31 // pred_region
        _
      $region36: #{psp_upsample_forward.2} parent=31 // pred_fallthru
        _
      // Predicated region
      $region37: #{psp_upsample_forward.2} parent=31 // pred_check
        %p1214 = pneg %p128
      $region38: #{psp_upsample_forward.2} parent=31 // pred_check_branch
        %1216 = sbr.rel (%p1214) target = $region40
      $region39: #{psp_upsample_forward.2} parent=31 // pred_region
        _
      $region40: #{psp_upsample_forward.2} parent=31 // pred_fallthru
        _
    $region32: #{psp_upsample_forward.2} parent=5 // pred_fallthru
      _
    %p1217 = scmp.le.s32.totalorder 2, %s11
    // Predicated region
    $region41: #{psp_upsample_forward.2} parent=5 // pred_check
      %p1218 = pneg %p1217
    $region42: #{psp_upsample_forward.2} parent=5 // pred_check_branch
      %1220 = sbr.rel (%p1218) target = $region44
    $region43: #{psp_upsample_forward.2} parent=5 // pred_region
      %s1221 = ssub.s32 %s11, 2
      // Predicated region
      $region45: #{psp_upsample_forward.2} parent=43 // pred_check
        %p1222 = pneg %p108
      $region46: #{psp_upsample_forward.2} parent=43 // pred_check_branch
        %1224 = sbr.rel (%p1222) target = $region48
      $region47: #{psp_upsample_forward.2} parent=43 // pred_region
        %p1225 = scmp.lt.s32.totalorder %s17, 1
        %s1226 = scalar_select %p1225, %s17, 1
        %s1227 = smul.addr %s1226, 9
        %s1228 = smul.addr %s1227, 4
        %s1229 = scalar_lea.vmem %s3, %s1228
      $region48: #{psp_upsample_forward.2} parent=43 // pred_fallthru
        _
      // Predicated region
      $region49: #{psp_upsample_forward.2} parent=43 // pred_check
        %p1230 = pneg %p134
      $region50: #{psp_upsample_forward.2} parent=43 // pred_check_branch
        %1232 = sbr.rel (%p1230) target = $region52
      $region51: #{psp_upsample_forward.2} parent=43 // pred_region
        %p1233 = scmp.lt.s32.totalorder %s17, 1
        %s1234 = scalar_select %p1233, %s17, 1
        %s1235 = smul.addr %s1234, 8
        %s1236 = scalar_lea.vmem %s4, %s1235
      $region52: #{psp_upsample_forward.2} parent=43 // pred_fallthru
        _
    $region44: #{psp_upsample_forward.2} parent=5 // pred_fallthru
      _
  $region6: #{psp_upsample_forward.2} parent=0 // loop_footer
    %s15 = sadd.s32 1, %s11
  $region7: #{psp_upsample_forward.2} parent=0 // loop_footer_branch
    %10 = sbr.rel target = $region3
  $region8: #{psp_upsample_forward.2} parent=0 // loop_exit
    _

</llo_original>
